<compile_context>
chip_gen: v7x
topology: tpu7x:2x2x1
jax: 0.10.0
libtpu: 0.0.40
codegen_flags: <defaults>
</compile_context>

<pallas_src>
import math

import jax
import jax.numpy as jnp
from jax.experimental import pallas as pl
from jax.experimental.pallas import tpu as pltpu

# ----------------------------- configuration --------------------------------
VOCAB = 100
TYPE_VOCAB = 2
MAX_POS = 16
HIDDEN = 128          # lane-dense stand-in for 768 (multiple of 128)
INTER = 512           # 4 * HIDDEN, lane-dense
NUM_CLASSES = 6
CLASSES_PAD = 128     # classifier output padded to a full lane width
BATCH = 2
SEQ = 8               # B*S = 16 rows -> multiple of the 8-sublane tile

_VMEM = pl.BlockSpec(memory_space=pltpu.MemorySpace.VMEM)
_SMEM = pl.BlockSpec(memory_space=pltpu.MemorySpace.SMEM)


# ------------------------------ Pallas kernel --------------------------------
def _layer_norm(x, gamma, beta, eps=1e-12):
    mu = jnp.mean(x, axis=-1, keepdims=True)
    var = jnp.mean((x - mu) ** 2, axis=-1, keepdims=True)
    return (x - mu) * jax.lax.rsqrt(var + eps) * gamma + beta


def _bert_classifier_kernel(vl_ref, x_ref,
                            wqkv_ref, bqkv_ref, wo_ref, bo_ref,
                            ln1g_ref, ln1b_ref,
                            w1_ref, b1_ref, w2_ref, b2_ref,
                            ln2g_ref, ln2b_ref,
                            wp_ref, bp_ref, wc_ref, bc_ref,
                            out_ref):
    """Fused: attention-mask gen + encoder layer + [CLS] pooler + classifier."""
    B, S, H = BATCH, SEQ, HIDDEN
    x2 = x_ref[...]                                   # (B*S, H) f32, pre-flattened

    # ---- fused QKV projection: one (B*S,H) @ (H,3H) MXU push -----------------
    qkv = jnp.dot(x2.astype(jnp.bfloat16), wqkv_ref[...],
                  preferred_element_type=jnp.float32) + bqkv_ref[...]
    # lane slices at multiples of 128 -> tile aligned
    q = qkv[:, 0 * H:1 * H].reshape(B, S, H)
    k = qkv[:, 1 * H:2 * H].reshape(B, S, H)
    v = qkv[:, 2 * H:3 * H].reshape(B, S, H)

    # ---- attention mask from valid_length (SMEM scalars) ---------------------
    # Reproduces gen_attention_mask: key positions >= valid_length[b] get -1e9.
    key_pos = jax.lax.broadcasted_iota(jnp.int32, (S, S), 1)      # (Sq, Sk)
    neg = jnp.float32(-1e9)
    bias_rows = []
    for b in range(B):                 # B is static & tiny
        vb = vl_ref[b]                 # scalar read from SMEM
        bias_rows.append(jnp.where(key_pos < vb, jnp.float32(0.0), neg))
    mask_bias = jnp.stack(bias_rows, axis=0)                      # (B, Sq, Sk)

    # ---- single-head scaled-dot-product attention ----------------------------
    scale = jnp.float32(1.0 / math.sqrt(H))
    scores = jnp.einsum('bqh,bkh->bqk',
                        q.astype(jnp.bfloat16), k.astype(jnp.bfloat16),
                        preferred_element_type=jnp.float32) * scale
    scores = scores + mask_bias
    scores = scores - jnp.max(scores, axis=-1, keepdims=True)
    p = jnp.exp(scores)
    probs = p * pl.reciprocal(jnp.sum(p, axis=-1, keepdims=True), approx=True)

    ctx = jnp.einsum('bqk,bkh->bqh',
                     probs.astype(jnp.bfloat16), v.astype(jnp.bfloat16),
                     preferred_element_type=jnp.float32).reshape(B * S, H)
    attn = jnp.dot(ctx.astype(jnp.bfloat16), wo_ref[...],
                   preferred_element_type=jnp.float32) + bo_ref[...]
    x2 = _layer_norm(x2 + attn, ln1g_ref[...], ln1b_ref[...])

    # ---- feed-forward ---------------------------------------------------------
    h = jnp.dot(x2.astype(jnp.bfloat16), w1_ref[...],
                preferred_element_type=jnp.float32) + b1_ref[...]
    h = jax.nn.gelu(h, approximate=True)
    ffn = jnp.dot(h.astype(jnp.bfloat16), w2_ref[...],
                  preferred_element_type=jnp.float32) + b2_ref[...]
    x2 = _layer_norm(x2 + ffn, ln2g_ref[...], ln2b_ref[...])

    # ---- BERT pooler ([CLS] = first token of each sequence) + classifier -----
    h_cls = x2.reshape(B, S, H)[:, 0, :]                          # (B, H)
    pooled = jnp.tanh(
        jnp.dot(h_cls.astype(jnp.bfloat16), wp_ref[...],
                preferred_element_type=jnp.float32) + bp_ref[...])
    # TODO(synk): dropout is skipped because dr_rate=None (module default).
    out_ref[...] = (
        jnp.dot(pooled.astype(jnp.bfloat16), wc_ref[...],
                preferred_element_type=jnp.float32) + bc_ref[...]
    ).astype(out_ref.dtype)                                       # (B, 128) lane-dense


# ------------------------------ kernel wrapper --------------------------------
def bert_classifier_pallas(params, x_flat, valid_length):
    B = BATCH
    args = (valid_length.astype(jnp.int32), x_flat,
            params['wqkv'], params['bqkv'], params['wo'], params['bo'],
            params['ln1_g'], params['ln1_b'],
            params['w1'], params['b1'], params['w2'], params['b2'],
            params['ln2_g'], params['ln2_b'],
            params['wp'], params['bp'], params['wc'], params['bc'])
    logits_pad = pl.pallas_call(
        _bert_classifier_kernel,
        out_shape=jax.ShapeDtypeStruct((B, CLASSES_PAD), jnp.float32),
        in_specs=[_SMEM] + [_VMEM] * (len(args) - 1),
        out_specs=_VMEM,
    )(*args)
    return logits_pad[:, :NUM_CLASSES]   # strip lane padding outside the kernel


# ------------------------------ parameters -----------------------------------
def init_params(key):
    ks = jax.random.split(key, 11)
    s = 0.02
    f32, bf16 = jnp.float32, jnp.bfloat16

    wq = jax.random.normal(ks[3], (HIDDEN, HIDDEN), f32) * s
    wk = jax.random.normal(ks[4], (HIDDEN, HIDDEN), f32) * s
    wv = jax.random.normal(ks[5], (HIDDEN, HIDDEN), f32) * s
    wc = jax.random.normal(ks[10], (HIDDEN, NUM_CLASSES), f32) * s
    wc_pad = jnp.zeros((HIDDEN, CLASSES_PAD), f32).at[:, :NUM_CLASSES].set(wc)

    p = {
        # embedding tables (plain-JAX gather path), f32
        'tok_emb': jax.random.normal(ks[0], (VOCAB, HIDDEN), f32) * s,
        'seg_emb': jax.random.normal(ks[1], (TYPE_VOCAB, HIDDEN), f32) * s,
        'pos_emb': jax.random.normal(ks[2], (MAX_POS, HIDDEN), f32) * s,
        # MXU weights stored bf16 (halves weight DMA; f32 accumulation in-kernel)
        'wqkv': jnp.concatenate([wq, wk, wv], axis=1).astype(bf16),   # (H, 3H)
        'wo': (jax.random.normal(ks[6], (HIDDEN, HIDDEN), f32) * s).astype(bf16),
        'w1': (jax.random.normal(ks[7], (HIDDEN, INTER), f32) * s).astype(bf16),
        'w2': (jax.random.normal(ks[8], (INTER, HIDDEN), f32) * s).astype(bf16),
        'wp': (jax.random.normal(ks[9], (HIDDEN, HIDDEN), f32) * s).astype(bf16),
        'wc': wc_pad.astype(bf16),                                     # (H, 128)
        # biases / layernorm params stay f32 (added post-matmul)
        'bqkv': jnp.zeros((1, 3 * HIDDEN), f32),
        'bo': jnp.zeros((1, HIDDEN), f32),
        'b1': jnp.zeros((1, INTER), f32),
        'b2': jnp.zeros((1, HIDDEN), f32),
        'bp': jnp.zeros((1, HIDDEN), f32),
        'bc': jnp.zeros((1, CLASSES_PAD), f32),
        'ln1_g': jnp.ones((1, HIDDEN), f32), 'ln1_b': jnp.zeros((1, HIDDEN), f32),
        'ln2_g': jnp.ones((1, HIDDEN), f32), 'ln2_b': jnp.zeros((1, HIDDEN), f32),
    }
    return p


# ------------------------------ forward pass ---------------------------------
def bert_classifier_forward(params, token_ids, valid_length, segment_ids):
    """Mirrors BERTClassifier.forward(token_ids, valid_length, segment_ids)."""
    B, S = token_ids.shape
    # embedding lookup (gather) — plain-JAX glue (no clean Pallas gather here)
    x = (params['tok_emb'][token_ids]
         + params['seg_emb'][segment_ids]
         + params['pos_emb'][:S][None, :, :])
    # flatten (B,S,H) -> (B*S,H) in the wrapper (free layout plumbing)
    x_flat = x.reshape(B * S, HIDDEN).astype(jnp.float32)
    # fused Pallas kernel: mask gen + encoder + pooler + classifier
    return bert_classifier_pallas(params, x_flat, valid_length)


# ---------------------------------- main --------------------------------------
if __name__ == "__main__":
    key = jax.random.PRNGKey(0)
    k_tok, k_seg, k_len, k_params = jax.random.split(key, 4)

    token_ids = jax.random.randint(k_tok, (BATCH, SEQ), 0, VOCAB, dtype=jnp.int32)
    segment_ids = jax.random.randint(k_seg, (BATCH, SEQ), 0, TYPE_VOCAB, dtype=jnp.int32)
    valid_length = jax.random.randint(k_len, (BATCH,), 1, SEQ + 1, dtype=jnp.int32)

    params = init_params(k_params)

    logits = bert_classifier_forward(params, token_ids, valid_length, segment_ids)
    logits = jax.block_until_ready(logits)

    assert logits.shape == (BATCH, NUM_CLASSES), logits.shape
    assert logits.dtype == jnp.float32
    assert bool(jnp.all(jnp.isfinite(logits)))
    print("KERNEL_OK")
</pallas_src>

<mosaic_0001>
module attributes {stable_mosaic.version = 11 : i64} {
  func.func @_bert_classifier_kernel(%arg0: memref<2xi32, #tpu.memory_space<smem>>, %arg1: memref<16x128xf32, #tpu.memory_space<vmem>>, %arg2: memref<128x384xbf16, #tpu.memory_space<vmem>>, %arg3: memref<1x384xf32, #tpu.memory_space<vmem>>, %arg4: memref<128x128xbf16, #tpu.memory_space<vmem>>, %arg5: memref<1x128xf32, #tpu.memory_space<vmem>>, %arg6: memref<1x128xf32, #tpu.memory_space<vmem>>, %arg7: memref<1x128xf32, #tpu.memory_space<vmem>>, %arg8: memref<128x512xbf16, #tpu.memory_space<vmem>>, %arg9: memref<1x512xf32, #tpu.memory_space<vmem>>, %arg10: memref<512x128xbf16, #tpu.memory_space<vmem>>, %arg11: memref<1x128xf32, #tpu.memory_space<vmem>>, %arg12: memref<1x128xf32, #tpu.memory_space<vmem>>, %arg13: memref<1x128xf32, #tpu.memory_space<vmem>>, %arg14: memref<128x128xbf16, #tpu.memory_space<vmem>>, %arg15: memref<1x128xf32, #tpu.memory_space<vmem>>, %arg16: memref<128x128xbf16, #tpu.memory_space<vmem>>, %arg17: memref<1x128xf32, #tpu.memory_space<vmem>>, %arg18: memref<2x128xf32, #tpu.memory_space<vmem>>) attributes {dimension_semantics = [], scalar_prefetch = 0 : i64, scratch_operands = 0 : i64, tpu.core_type = #tpu.core_type<tc>} {
    %c0 = arith.constant 0 : index
    %c0_0 = arith.constant 0 : index
    %0 = vector.load %arg1[%c0, %c0_0] : memref<16x128xf32, #tpu.memory_space<vmem>>, vector<16x128xf32>
    %1 = arith.truncf %0 : vector<16x128xf32> to vector<16x128xbf16>
    %c0_1 = arith.constant 0 : index
    %c0_2 = arith.constant 0 : index
    %2 = vector.load %arg2[%c0_1, %c0_2] : memref<128x384xbf16, #tpu.memory_space<vmem>>, vector<128x384xbf16>
    %cst = arith.constant dense<0.000000e+00> : vector<16x384xf32>
    %3 = tpu.matmul %1, %2, %cst {dimension_numbers = #tpu.dot_dimension_numbers<[1], [0], [0], [1], [0, 0, 1, 1], [], []>} : vector<16x128xbf16>, vector<128x384xbf16>, vector<16x384xf32> -> vector<16x384xf32>
    %c0_3 = arith.constant 0 : index
    %c0_4 = arith.constant 0 : index
    %4 = vector.load %arg3[%c0_3, %c0_4] : memref<1x384xf32, #tpu.memory_space<vmem>>, vector<1x384xf32>
    %5 = vector.broadcast %4 : vector<1x384xf32> to vector<16x384xf32>
    %6 = arith.addf %3, %5 : vector<16x384xf32>
    %7 = vector.extract_strided_slice %6 {offsets = [0, 0], sizes = [16, 128], strides = [1, 1]} : vector<16x384xf32> to vector<16x128xf32>
    %8 = vector.shape_cast %7 : vector<16x128xf32> to vector<2x8x128xf32>
    %9 = vector.extract_strided_slice %6 {offsets = [0, 128], sizes = [16, 128], strides = [1, 1]} : vector<16x384xf32> to vector<16x128xf32>
    %10 = vector.shape_cast %9 : vector<16x128xf32> to vector<2x8x128xf32>
    %11 = vector.extract_strided_slice %6 {offsets = [0, 256], sizes = [16, 128], strides = [1, 1]} : vector<16x384xf32> to vector<16x128xf32>
    %12 = vector.shape_cast %11 : vector<16x128xf32> to vector<2x8x128xf32>
    %13 = tpu.iota {dimensions = array<i32: 1>} : vector<8x8xi32>
    %c0_5 = arith.constant 0 : index
    %14 = memref.load %arg0[%c0_5] : memref<2xi32, #tpu.memory_space<smem>>
    %15 = vector.broadcast %14 : i32 to vector<8x8xi32>
    %16 = arith.cmpi slt, %13, %15 : vector<8x8xi32>
    %cst_6 = arith.constant 0.000000e+00 : f32
    %cst_7 = arith.constant -1.000000e+09 : f32
    %17 = vector.broadcast %cst_6 : f32 to vector<8x8xf32>
    %18 = vector.broadcast %cst_7 : f32 to vector<8x8xf32>
    %19 = arith.select %16, %17, %18 : vector<8x8xi1>, vector<8x8xf32>
    %c1 = arith.constant 1 : index
    %20 = memref.load %arg0[%c1] : memref<2xi32, #tpu.memory_space<smem>>
    %21 = vector.broadcast %20 : i32 to vector<8x8xi32>
    %22 = arith.cmpi slt, %13, %21 : vector<8x8xi32>
    %cst_8 = arith.constant 0.000000e+00 : f32
    %cst_9 = arith.constant -1.000000e+09 : f32
    %23 = vector.broadcast %cst_8 : f32 to vector<8x8xf32>
    %24 = vector.broadcast %cst_9 : f32 to vector<8x8xf32>
    %25 = arith.select %22, %23, %24 : vector<8x8xi1>, vector<8x8xf32>
    %26 = vector.shape_cast %19 : vector<8x8xf32> to vector<1x8x8xf32>
    %27 = vector.shape_cast %25 : vector<8x8xf32> to vector<1x8x8xf32>
    %28 = tpu.concatenate %26, %27 in 0 : vector<1x8x8xf32>, vector<1x8x8xf32> -> vector<2x8x8xf32>
    %29 = arith.truncf %8 : vector<2x8x128xf32> to vector<2x8x128xbf16>
    %30 = arith.truncf %10 : vector<2x8x128xf32> to vector<2x8x128xbf16>
    "tpu.trace_start"() <{level = 10 : i32, message = "bqh,bkh->bqk"}> : () -> ()
    %cst_10 = arith.constant dense<0.000000e+00> : vector<2x8x8xf32>
    %31 = tpu.matmul %29, %30, %cst_10 {dimension_numbers = #tpu.dot_dimension_numbers<[2], [2], [1], [1], [0, 0, 0, 1, 1, 1], [0], [0]>} : vector<2x8x128xbf16>, vector<2x8x128xbf16>, vector<2x8x8xf32> -> vector<2x8x8xf32>
    "tpu.trace_stop"() : () -> ()
    %cst_11 = arith.constant 0.0883883461 : f32
    %32 = vector.broadcast %cst_11 : f32 to vector<2x8x8xf32>
    %33 = arith.mulf %31, %32 : vector<2x8x8xf32>
    %34 = arith.addf %33, %28 : vector<2x8x8xf32>
    %cst_12 = arith.constant dense<0xFF800000> : vector<2x8xf32>
    %35 = vector.multi_reduction <maximumf>, %34, %cst_12 [2] : vector<2x8x8xf32> to vector<2x8xf32>
    %36 = vector.shape_cast %35 : vector<2x8xf32> to vector<2x8x1xf32>
    %37 = vector.broadcast %36 : vector<2x8x1xf32> to vector<2x8x8xf32>
    %38 = arith.subf %34, %37 : vector<2x8x8xf32>
    %39 = math.exp %38 : vector<2x8x8xf32>
    %cst_13 = arith.constant dense<0.000000e+00> : vector<2x8xf32>
    %40 = vector.multi_reduction <add>, %39, %cst_13 [2] : vector<2x8x8xf32> to vector<2x8xf32>
    %41 = vector.shape_cast %40 : vector<2x8xf32> to vector<2x8x1xf32>
    %42 = tpu.reciprocal %41 {approx = true} : vector<2x8x1xf32> -> vector<2x8x1xf32>
    %43 = vector.broadcast %42 : vector<2x8x1xf32> to vector<2x8x8xf32>
    %44 = arith.mulf %39, %43 : vector<2x8x8xf32>
    %45 = arith.truncf %44 : vector<2x8x8xf32> to vector<2x8x8xbf16>
    %46 = arith.truncf %12 : vector<2x8x128xf32> to vector<2x8x128xbf16>
    "tpu.trace_start"() <{level = 10 : i32, message = "bqk,bkh->bqh"}> : () -> ()
    %cst_14 = arith.constant dense<0.000000e+00> : vector<2x8x128xf32>
    %47 = tpu.matmul %45, %46, %cst_14 {dimension_numbers = #tpu.dot_dimension_numbers<[2], [1], [1], [2], [0, 0, 0, 1, 1, 2], [0], [0]>} : vector<2x8x8xbf16>, vector<2x8x128xbf16>, vector<2x8x128xf32> -> vector<2x8x128xf32>
    "tpu.trace_stop"() : () -> ()
    %48 = vector.shape_cast %47 : vector<2x8x128xf32> to vector<16x128xf32>
    %49 = arith.truncf %48 : vector<16x128xf32> to vector<16x128xbf16>
    %c0_15 = arith.constant 0 : index
    %c0_16 = arith.constant 0 : index
    %50 = vector.load %arg4[%c0_15, %c0_16] : memref<128x128xbf16, #tpu.memory_space<vmem>>, vector<128x128xbf16>
    %cst_17 = arith.constant dense<0.000000e+00> : vector<16x128xf32>
    %51 = tpu.matmul %49, %50, %cst_17 {dimension_numbers = #tpu.dot_dimension_numbers<[1], [0], [0], [1], [0, 0, 1, 1], [], []>} : vector<16x128xbf16>, vector<128x128xbf16>, vector<16x128xf32> -> vector<16x128xf32>
    %c0_18 = arith.constant 0 : index
    %c0_19 = arith.constant 0 : index
    %52 = vector.load %arg5[%c0_18, %c0_19] : memref<1x128xf32, #tpu.memory_space<vmem>>, vector<1x128xf32>
    %53 = vector.broadcast %52 : vector<1x128xf32> to vector<16x128xf32>
    %54 = arith.addf %51, %53 : vector<16x128xf32>
    %55 = arith.addf %0, %54 : vector<16x128xf32>
    %c0_20 = arith.constant 0 : index
    %c0_21 = arith.constant 0 : index
    %56 = vector.load %arg6[%c0_20, %c0_21] : memref<1x128xf32, #tpu.memory_space<vmem>>, vector<1x128xf32>
    %c0_22 = arith.constant 0 : index
    %c0_23 = arith.constant 0 : index
    %57 = vector.load %arg7[%c0_22, %c0_23] : memref<1x128xf32, #tpu.memory_space<vmem>>, vector<1x128xf32>
    %cst_24 = arith.constant dense<0.000000e+00> : vector<16xf32>
    %58 = vector.multi_reduction <add>, %55, %cst_24 [1] : vector<16x128xf32> to vector<16xf32>
    %59 = vector.shape_cast %58 : vector<16xf32> to vector<16x1xf32>
    %cst_25 = arith.constant 1.280000e+02 : f32
    %60 = vector.broadcast %cst_25 : f32 to vector<16x1xf32>
    %61 = arith.divf %59, %60 : vector<16x1xf32>
    %62 = vector.broadcast %61 : vector<16x1xf32> to vector<16x128xf32>
    %63 = arith.subf %55, %62 : vector<16x128xf32>
    %64 = arith.mulf %63, %63 : vector<16x128xf32>
    %cst_26 = arith.constant dense<0.000000e+00> : vector<16xf32>
    %65 = vector.multi_reduction <add>, %64, %cst_26 [1] : vector<16x128xf32> to vector<16xf32>
    %66 = vector.shape_cast %65 : vector<16xf32> to vector<16x1xf32>
    %cst_27 = arith.constant 1.280000e+02 : f32
    %67 = vector.broadcast %cst_27 : f32 to vector<16x1xf32>
    %68 = arith.divf %66, %67 : vector<16x1xf32>
    %69 = vector.broadcast %61 : vector<16x1xf32> to vector<16x128xf32>
    %70 = arith.subf %55, %69 : vector<16x128xf32>
    %cst_28 = arith.constant 9.99999996E-13 : f32
    %71 = vector.broadcast %cst_28 : f32 to vector<16x1xf32>
    %72 = arith.addf %68, %71 : vector<16x1xf32>
    %73 = math.rsqrt %72 : vector<16x1xf32>
    %74 = vector.broadcast %73 : vector<16x1xf32> to vector<16x128xf32>
    %75 = arith.mulf %70, %74 : vector<16x128xf32>
    %76 = vector.broadcast %56 : vector<1x128xf32> to vector<16x128xf32>
    %77 = arith.mulf %75, %76 : vector<16x128xf32>
    %78 = vector.broadcast %57 : vector<1x128xf32> to vector<16x128xf32>
    %79 = arith.addf %77, %78 : vector<16x128xf32>
    %80 = arith.truncf %79 : vector<16x128xf32> to vector<16x128xbf16>
    %c0_29 = arith.constant 0 : index
    %c0_30 = arith.constant 0 : index
    %81 = vector.load %arg8[%c0_29, %c0_30] : memref<128x512xbf16, #tpu.memory_space<vmem>>, vector<128x512xbf16>
    %cst_31 = arith.constant dense<0.000000e+00> : vector<16x512xf32>
    %82 = tpu.matmul %80, %81, %cst_31 {dimension_numbers = #tpu.dot_dimension_numbers<[1], [0], [0], [1], [0, 0, 1, 1], [], []>} : vector<16x128xbf16>, vector<128x512xbf16>, vector<16x512xf32> -> vector<16x512xf32>
    %c0_32 = arith.constant 0 : index
    %c0_33 = arith.constant 0 : index
    %83 = vector.load %arg9[%c0_32, %c0_33] : memref<1x512xf32, #tpu.memory_space<vmem>>, vector<1x512xf32>
    %84 = vector.broadcast %83 : vector<1x512xf32> to vector<16x512xf32>
    %85 = arith.addf %82, %84 : vector<16x512xf32>
    %86 = arith.mulf %85, %85 : vector<16x512xf32>
    %87 = arith.mulf %85, %86 : vector<16x512xf32>
    %cst_34 = arith.constant 4.471500e-02 : f32
    %88 = vector.broadcast %cst_34 : f32 to vector<16x512xf32>
    %89 = arith.mulf %88, %87 : vector<16x512xf32>
    %90 = arith.addf %85, %89 : vector<16x512xf32>
    %cst_35 = arith.constant 0.797884583 : f32
    %91 = vector.broadcast %cst_35 : f32 to vector<16x512xf32>
    %92 = arith.mulf %91, %90 : vector<16x512xf32>
    %93 = math.tanh %92 : vector<16x512xf32>
    %cst_36 = arith.constant 1.000000e+00 : f32
    %94 = vector.broadcast %cst_36 : f32 to vector<16x512xf32>
    %95 = arith.addf %94, %93 : vector<16x512xf32>
    %cst_37 = arith.constant 5.000000e-01 : f32
    %96 = vector.broadcast %cst_37 : f32 to vector<16x512xf32>
    %97 = arith.mulf %96, %95 : vector<16x512xf32>
    %98 = arith.mulf %85, %97 : vector<16x512xf32>
    %99 = arith.truncf %98 : vector<16x512xf32> to vector<16x512xbf16>
    %c0_38 = arith.constant 0 : index
    %c0_39 = arith.constant 0 : index
    %100 = vector.load %arg10[%c0_38, %c0_39] : memref<512x128xbf16, #tpu.memory_space<vmem>>, vector<512x128xbf16>
    %cst_40 = arith.constant dense<0.000000e+00> : vector<16x128xf32>
    %101 = tpu.matmul %99, %100, %cst_40 {dimension_numbers = #tpu.dot_dimension_numbers<[1], [0], [0], [1], [0, 0, 1, 1], [], []>} : vector<16x512xbf16>, vector<512x128xbf16>, vector<16x128xf32> -> vector<16x128xf32>
    %c0_41 = arith.constant 0 : index
    %c0_42 = arith.constant 0 : index
    %102 = vector.load %arg11[%c0_41, %c0_42] : memref<1x128xf32, #tpu.memory_space<vmem>>, vector<1x128xf32>
    %103 = vector.broadcast %102 : vector<1x128xf32> to vector<16x128xf32>
    %104 = arith.addf %101, %103 : vector<16x128xf32>
    %105 = arith.addf %79, %104 : vector<16x128xf32>
    %c0_43 = arith.constant 0 : index
    %c0_44 = arith.constant 0 : index
    %106 = vector.load %arg12[%c0_43, %c0_44] : memref<1x128xf32, #tpu.memory_space<vmem>>, vector<1x128xf32>
    %c0_45 = arith.constant 0 : index
    %c0_46 = arith.constant 0 : index
    %107 = vector.load %arg13[%c0_45, %c0_46] : memref<1x128xf32, #tpu.memory_space<vmem>>, vector<1x128xf32>
    %cst_47 = arith.constant dense<0.000000e+00> : vector<16xf32>
    %108 = vector.multi_reduction <add>, %105, %cst_47 [1] : vector<16x128xf32> to vector<16xf32>
    %109 = vector.shape_cast %108 : vector<16xf32> to vector<16x1xf32>
    %cst_48 = arith.constant 1.280000e+02 : f32
    %110 = vector.broadcast %cst_48 : f32 to vector<16x1xf32>
    %111 = arith.divf %109, %110 : vector<16x1xf32>
    %112 = vector.broadcast %111 : vector<16x1xf32> to vector<16x128xf32>
    %113 = arith.subf %105, %112 : vector<16x128xf32>
    %114 = arith.mulf %113, %113 : vector<16x128xf32>
    %cst_49 = arith.constant dense<0.000000e+00> : vector<16xf32>
    %115 = vector.multi_reduction <add>, %114, %cst_49 [1] : vector<16x128xf32> to vector<16xf32>
    %116 = vector.shape_cast %115 : vector<16xf32> to vector<16x1xf32>
    %cst_50 = arith.constant 1.280000e+02 : f32
    %117 = vector.broadcast %cst_50 : f32 to vector<16x1xf32>
    %118 = arith.divf %116, %117 : vector<16x1xf32>
    %119 = vector.broadcast %111 : vector<16x1xf32> to vector<16x128xf32>
    %120 = arith.subf %105, %119 : vector<16x128xf32>
    %cst_51 = arith.constant 9.99999996E-13 : f32
    %121 = vector.broadcast %cst_51 : f32 to vector<16x1xf32>
    %122 = arith.addf %118, %121 : vector<16x1xf32>
    %123 = math.rsqrt %122 : vector<16x1xf32>
    %124 = vector.broadcast %123 : vector<16x1xf32> to vector<16x128xf32>
    %125 = arith.mulf %120, %124 : vector<16x128xf32>
    %126 = vector.broadcast %106 : vector<1x128xf32> to vector<16x128xf32>
    %127 = arith.mulf %125, %126 : vector<16x128xf32>
    %128 = vector.broadcast %107 : vector<1x128xf32> to vector<16x128xf32>
    %129 = arith.addf %127, %128 : vector<16x128xf32>
    %130 = vector.shape_cast %129 : vector<16x128xf32> to vector<2x8x128xf32>
    %131 = vector.extract_strided_slice %130 {offsets = [0, 0, 0], sizes = [2, 1, 128], strides = [1, 1, 1]} : vector<2x8x128xf32> to vector<2x1x128xf32>
    %132 = vector.shape_cast %131 : vector<2x1x128xf32> to vector<2x128xf32>
    %133 = arith.truncf %132 : vector<2x128xf32> to vector<2x128xbf16>
    %c0_52 = arith.constant 0 : index
    %c0_53 = arith.constant 0 : index
    %134 = vector.load %arg14[%c0_52, %c0_53] : memref<128x128xbf16, #tpu.memory_space<vmem>>, vector<128x128xbf16>
    %cst_54 = arith.constant dense<0.000000e+00> : vector<2x128xf32>
    %135 = tpu.matmul %133, %134, %cst_54 {dimension_numbers = #tpu.dot_dimension_numbers<[1], [0], [0], [1], [0, 0, 1, 1], [], []>} : vector<2x128xbf16>, vector<128x128xbf16>, vector<2x128xf32> -> vector<2x128xf32>
    %c0_55 = arith.constant 0 : index
    %c0_56 = arith.constant 0 : index
    %136 = vector.load %arg15[%c0_55, %c0_56] : memref<1x128xf32, #tpu.memory_space<vmem>>, vector<1x128xf32>
    %137 = vector.broadcast %136 : vector<1x128xf32> to vector<2x128xf32>
    %138 = arith.addf %135, %137 : vector<2x128xf32>
    %139 = math.tanh %138 : vector<2x128xf32>
    %140 = arith.truncf %139 : vector<2x128xf32> to vector<2x128xbf16>
    %c0_57 = arith.constant 0 : index
    %c0_58 = arith.constant 0 : index
    %141 = vector.load %arg16[%c0_57, %c0_58] : memref<128x128xbf16, #tpu.memory_space<vmem>>, vector<128x128xbf16>
    %cst_59 = arith.constant dense<0.000000e+00> : vector<2x128xf32>
    %142 = tpu.matmul %140, %141, %cst_59 {dimension_numbers = #tpu.dot_dimension_numbers<[1], [0], [0], [1], [0, 0, 1, 1], [], []>} : vector<2x128xbf16>, vector<128x128xbf16>, vector<2x128xf32> -> vector<2x128xf32>
    %c0_60 = arith.constant 0 : index
    %c0_61 = arith.constant 0 : index
    %143 = vector.load %arg17[%c0_60, %c0_61] : memref<1x128xf32, #tpu.memory_space<vmem>>, vector<1x128xf32>
    %144 = vector.broadcast %143 : vector<1x128xf32> to vector<2x128xf32>
    %145 = arith.addf %142, %144 : vector<2x128xf32>
    %c0_62 = arith.constant 0 : index
    %c0_63 = arith.constant 0 : index
    %146 = vector.load %arg18[%c0_62, %c0_63] : memref<2x128xf32, #tpu.memory_space<vmem>>, vector<2x128xf32>
    tpu.vector_store %arg18[%c0_62, %c0_63], %145 {strides = array<i32>} : memref<2x128xf32, #tpu.memory_space<vmem>>, vector<2x128xf32>,
    return
  }
}

</mosaic_0001>

<llo_original>
// kernel: tpu_custom_call.1
$region0: #{tpu_custom_call.1}
  #allocation0 [shape = 'u32[]', space=smem, size = 0x4, offset = 0x4, fixed_abs, tag = 'smem constant byte address 0x4 - core index']
  #allocation1 [shape = 'u32[144,128]{1,0:T(1,128)}', space=vmem, size = 0x12000, scoped, tag = 'internal scratch']
  %s0 = inlined_call_operand.hbm [shape: s32[2], index: 0, kind: input, shape index: {}]
  %s1 = inlined_call_operand.hbm [shape: f32[16,128], index: 1, kind: input, shape index: {}]
  %s2 = inlined_call_operand.hbm [shape: bf16[128,384], index: 2, kind: input, shape index: {}]
  %s3 = inlined_call_operand.vmem [shape: f32[1,384], index: 3, kind: input, shape index: {}]
  %s4 = inlined_call_operand.hbm [shape: bf16[128,128], index: 4, kind: input, shape index: {}]
  %s5 = inlined_call_operand.vmem [shape: f32[1,128], index: 5, kind: input, shape index: {}]
  %s6 = inlined_call_operand.vmem [shape: f32[1,128], index: 6, kind: input, shape index: {}]
  %s7 = inlined_call_operand.vmem [shape: f32[1,128], index: 7, kind: input, shape index: {}]
  %s8 = inlined_call_operand.hbm [shape: bf16[128,512], index: 8, kind: input, shape index: {}]
  %s9 = inlined_call_operand.vmem [shape: f32[1,512], index: 9, kind: input, shape index: {}]
  %s10 = inlined_call_operand.hbm [shape: bf16[512,128], index: 10, kind: input, shape index: {}]
  %s11 = inlined_call_operand.vmem [shape: f32[1,128], index: 11, kind: input, shape index: {}]
  %s12 = inlined_call_operand.vmem [shape: f32[1,128], index: 12, kind: input, shape index: {}]
  %s13 = inlined_call_operand.vmem [shape: f32[1,128], index: 13, kind: input, shape index: {}]
  %s14 = inlined_call_operand.hbm [shape: bf16[128,128], index: 14, kind: input, shape index: {}]
  %s15 = inlined_call_operand.vmem [shape: f32[1,128], index: 15, kind: input, shape index: {}]
  %s16 = inlined_call_operand.hbm [shape: bf16[128,128], index: 16, kind: input, shape index: {}]
  %s17 = inlined_call_operand.vmem [shape: f32[1,128], index: 17, kind: input, shape index: {}]
  %s18 = inlined_call_operand.hbm [shape: f32[2,128], index: 18, kind: output, shape index: {}]
  %s19 = sld [smem:[#allocation0]]
  $region114: #{tpu_custom_call.1} parent=0
    _
  %s21 = ssub.s32 1, %s19
  %s22 = scalar_select 0, %s21, %s19
  $region1: #{tpu_custom_call.1} parent=0
    #allocation2 [shape = 'u8[512]{0}', space=smem, size = 0x200, scoped, tag = 'input window, operand 0, single buffered']
    #allocation3 [shape = 's32[1]{0}', space=sflag, size = 0x4, scoped, tag = 'scoped memory for tpu_custom_call.1']
    #allocation4 [shape = 's32[1]{0}', space=sflag, size = 0x4, scoped, tag = 'scoped memory for tpu_custom_call.1']
    #allocation5 [shape = 's32[1]{0}', space=sflag, size = 0x4, scoped, tag = 'scoped memory for tpu_custom_call.1']
    #allocation6 [shape = 'u8[8192]{0}', space=vmem, size = 0x2000, scoped, tag = 'input window, operand 1, single buffered']
    #allocation7 [shape = 'u8[98304]{0}', space=vmem, size = 0x18000, scoped, tag = 'input window, operand 2, single buffered']
    #allocation8 [shape = 's32[1]{0}', space=sflag, size = 0x4, scoped, tag = 'scoped memory for tpu_custom_call.1']
    #allocation9 [shape = 'u8[32768]{0}', space=vmem, size = 0x8000, scoped, tag = 'input window, operand 4, single buffered']
    #allocation10 [shape = 'u8[131072]{0}', space=vmem, size = 0x20000, scoped, tag = 'input window, operand 8, single buffered']
    #allocation11 [shape = 's32[1]{0}', space=sflag, size = 0x4, scoped, tag = 'scoped memory for tpu_custom_call.1']
    #allocation12 [shape = 'u8[131072]{0}', space=vmem, size = 0x20000, scoped, tag = 'input window, operand 10, single buffered']
    #allocation13 [shape = 'u8[32768]{0}', space=vmem, size = 0x8000, scoped, tag = 'input window, operand 14, single buffered']
    #allocation14 [shape = 's32[1]{0}', space=sflag, size = 0x4, scoped, tag = 'scoped memory for tpu_custom_call.1']
    #allocation15 [shape = 'u8[32768]{0}', space=vmem, size = 0x8000, scoped, tag = 'input window, operand 16, single buffered']
    #allocation16 [shape = 'u8[1024]{0}', space=vmem, size = 0x400, scoped, tag = 'output window, operand 0, single buffered']
    %23 = vsyncpa [#allocation5], 0
    %24 = vsyncpa [#allocation3], 0
    %25 = vsyncpa [#allocation8], 0
    %26 = vsyncpa [#allocation11], 0
    %27 = vsyncpa [#allocation14], 0
    %28 = vsyncpa [#allocation4], 0
    // Predicated region
    $region2: #{tpu_custom_call.1} parent=1 // pred_check
      _
    $region3: #{tpu_custom_call.1} parent=1 // pred_check_branch
      %30 = sbr.rel (0) target = $region5
    $region4: #{tpu_custom_call.1} parent=1 // pred_region
      %s32 = ssub.s32 16, 16
      %33 = vsyncadd [#allocation5], %s32
      %36 = dma.hbm_to_smem %s0, 16, [#allocation2], [#allocation5]
    $region5: #{tpu_custom_call.1} parent=1 // pred_fallthru
      _
    // Predicated region
    $region6: #{tpu_custom_call.1} parent=1 // pred_check
      _
    $region7: #{tpu_custom_call.1} parent=1 // pred_check_branch
      %38 = sbr.rel (0) target = $region9
    $region8: #{tpu_custom_call.1} parent=1 // pred_region
      %s40 = ssub.s32 256, 256
      %41 = vsyncadd [#allocation3], %s40
      %s42 = sshll.u32 [#allocation6], 4
      %s43 = int_to_ptr.vmem [resolvable:$true] %s42
      %48 = dma.hbm_to_vmem [thread:$0]  %s1, 256, %s43, [#allocation3], 128, 128, 8
    $region9: #{tpu_custom_call.1} parent=1 // pred_fallthru
      _
    // Predicated region
    $region10: #{tpu_custom_call.1} parent=1 // pred_check
      _
    $region11: #{tpu_custom_call.1} parent=1 // pred_check_branch
      %50 = sbr.rel (0) target = $region13
    $region12: #{tpu_custom_call.1} parent=1 // pred_region
      %s52 = ssub.s32 3072, 3072
      %53 = vsyncadd [#allocation8], %s52
      %s54 = sshll.u32 [#allocation7], 4
      %s55 = int_to_ptr.vmem [resolvable:$true] %s54
      %60 = dma.hbm_to_vmem [thread:$0]  %s2, 3072, %s55, [#allocation8], 192, 192, 12
    $region13: #{tpu_custom_call.1} parent=1 // pred_fallthru
      _
    // Predicated region
    $region14: #{tpu_custom_call.1} parent=1 // pred_check
      _
    $region15: #{tpu_custom_call.1} parent=1 // pred_check_branch
      %62 = sbr.rel (0) target = $region17
    $region16: #{tpu_custom_call.1} parent=1 // pred_region
      _
    $region17: #{tpu_custom_call.1} parent=1 // pred_fallthru
      _
    // Predicated region
    $region18: #{tpu_custom_call.1} parent=1 // pred_check
      _
    $region19: #{tpu_custom_call.1} parent=1 // pred_check_branch
      %64 = sbr.rel (0) target = $region21
    $region20: #{tpu_custom_call.1} parent=1 // pred_region
      %s66 = ssub.s32 1024, 1024
      %67 = vsyncadd [#allocation8], %s66
      %s68 = sshll.u32 [#allocation9], 4
      %s69 = int_to_ptr.vmem [resolvable:$true] %s68
      %74 = dma.hbm_to_vmem [thread:$0]  %s4, 1024, %s69, [#allocation8], 64, 64, 4
    $region21: #{tpu_custom_call.1} parent=1 // pred_fallthru
      _
    // Predicated region
    $region22: #{tpu_custom_call.1} parent=1 // pred_check
      _
    $region23: #{tpu_custom_call.1} parent=1 // pred_check_branch
      %76 = sbr.rel (0) target = $region25
    $region24: #{tpu_custom_call.1} parent=1 // pred_region
      _
    $region25: #{tpu_custom_call.1} parent=1 // pred_fallthru
      _
    // Predicated region
    $region26: #{tpu_custom_call.1} parent=1 // pred_check
      _
    $region27: #{tpu_custom_call.1} parent=1 // pred_check_branch
      %78 = sbr.rel (0) target = $region29
    $region28: #{tpu_custom_call.1} parent=1 // pred_region
      _
    $region29: #{tpu_custom_call.1} parent=1 // pred_fallthru
      _
    // Predicated region
    $region30: #{tpu_custom_call.1} parent=1 // pred_check
      _
    $region31: #{tpu_custom_call.1} parent=1 // pred_check_branch
      %80 = sbr.rel (0) target = $region33
    $region32: #{tpu_custom_call.1} parent=1 // pred_region
      _
    $region33: #{tpu_custom_call.1} parent=1 // pred_fallthru
      _
    // Predicated region
    $region34: #{tpu_custom_call.1} parent=1 // pred_check
      _
    $region35: #{tpu_custom_call.1} parent=1 // pred_check_branch
      %82 = sbr.rel (0) target = $region37
    $region36: #{tpu_custom_call.1} parent=1 // pred_region
      %s84 = ssub.s32 4096, 4096
      %85 = vsyncadd [#allocation11], %s84
      %s86 = sshll.u32 [#allocation10], 4
      %s87 = int_to_ptr.vmem [resolvable:$true] %s86
      %92 = dma.hbm_to_vmem [thread:$0]  %s8, 4096, %s87, [#allocation11], 256, 256, 16
    $region37: #{tpu_custom_call.1} parent=1 // pred_fallthru
      _
    // Predicated region
    $region38: #{tpu_custom_call.1} parent=1 // pred_check
      _
    $region39: #{tpu_custom_call.1} parent=1 // pred_check_branch
      %94 = sbr.rel (0) target = $region41
    $region40: #{tpu_custom_call.1} parent=1 // pred_region
      _
    $region41: #{tpu_custom_call.1} parent=1 // pred_fallthru
      _
    // Predicated region
    $region42: #{tpu_custom_call.1} parent=1 // pred_check
      _
    $region43: #{tpu_custom_call.1} parent=1 // pred_check_branch
      %96 = sbr.rel (0) target = $region45
    $region44: #{tpu_custom_call.1} parent=1 // pred_region
      %s98 = ssub.s32 4096, 4096
      %99 = vsyncadd [#allocation11], %s98
      %s100 = sshll.u32 [#allocation12], 4
      %s101 = int_to_ptr.vmem [resolvable:$true] %s100
      %106 = dma.hbm_to_vmem [thread:$0]  %s10, 4096, %s101, [#allocation11], 64, 64, 4
    $region45: #{tpu_custom_call.1} parent=1 // pred_fallthru
      _
    // Predicated region
    $region46: #{tpu_custom_call.1} parent=1 // pred_check
      _
    $region47: #{tpu_custom_call.1} parent=1 // pred_check_branch
      %108 = sbr.rel (0) target = $region49
    $region48: #{tpu_custom_call.1} parent=1 // pred_region
      _
    $region49: #{tpu_custom_call.1} parent=1 // pred_fallthru
      _
    // Predicated region
    $region50: #{tpu_custom_call.1} parent=1 // pred_check
      _
    $region51: #{tpu_custom_call.1} parent=1 // pred_check_branch
      %110 = sbr.rel (0) target = $region53
    $region52: #{tpu_custom_call.1} parent=1 // pred_region
      _
    $region53: #{tpu_custom_call.1} parent=1 // pred_fallthru
      _
    // Predicated region
    $region54: #{tpu_custom_call.1} parent=1 // pred_check
      _
    $region55: #{tpu_custom_call.1} parent=1 // pred_check_branch
      %112 = sbr.rel (0) target = $region57
    $region56: #{tpu_custom_call.1} parent=1 // pred_region
      _
    $region57: #{tpu_custom_call.1} parent=1 // pred_fallthru
      _
    // Predicated region
    $region58: #{tpu_custom_call.1} parent=1 // pred_check
      _
    $region59: #{tpu_custom_call.1} parent=1 // pred_check_branch
      %114 = sbr.rel (0) target = $region61
    $region60: #{tpu_custom_call.1} parent=1 // pred_region
      %s116 = ssub.s32 1024, 1024
      %117 = vsyncadd [#allocation14], %s116
      %s118 = sshll.u32 [#allocation13], 4
      %s119 = int_to_ptr.vmem [resolvable:$true] %s118
      %124 = dma.hbm_to_vmem [thread:$0]  %s14, 1024, %s119, [#allocation14], 64, 64, 4
    $region61: #{tpu_custom_call.1} parent=1 // pred_fallthru
      _
    // Predicated region
    $region62: #{tpu_custom_call.1} parent=1 // pred_check
      _
    $region63: #{tpu_custom_call.1} parent=1 // pred_check_branch
      %126 = sbr.rel (0) target = $region65
    $region64: #{tpu_custom_call.1} parent=1 // pred_region
      _
    $region65: #{tpu_custom_call.1} parent=1 // pred_fallthru
      _
    // Predicated region
    $region66: #{tpu_custom_call.1} parent=1 // pred_check
      _
    $region67: #{tpu_custom_call.1} parent=1 // pred_check_branch
      %128 = sbr.rel (0) target = $region69
    $region68: #{tpu_custom_call.1} parent=1 // pred_region
      %s130 = ssub.s32 1024, 1024
      %131 = vsyncadd [#allocation14], %s130
      %s132 = sshll.u32 [#allocation15], 4
      %s133 = int_to_ptr.vmem [resolvable:$true] %s132
      %138 = dma.hbm_to_vmem [thread:$0]  %s16, 1024, %s133, [#allocation14], 64, 64, 4
    $region69: #{tpu_custom_call.1} parent=1 // pred_fallthru
      _
    // Predicated region
    $region70: #{tpu_custom_call.1} parent=1 // pred_check
      _
    $region71: #{tpu_custom_call.1} parent=1 // pred_check_branch
      %140 = sbr.rel (0) target = $region73
    $region72: #{tpu_custom_call.1} parent=1 // pred_region
      _
    $region73: #{tpu_custom_call.1} parent=1 // pred_fallthru
      _
    // Predicated region
    $region74: #{tpu_custom_call.1} parent=1 // pred_check
      _
    $region75: #{tpu_custom_call.1} parent=1 // pred_check_branch
      %142 = sbr.rel (0) target = $region77
    $region76: #{tpu_custom_call.1} parent=1 // pred_region
      %143 = dma.done [#allocation5], 16
    $region77: #{tpu_custom_call.1} parent=1 // pred_fallthru
      _
    // Predicated region
    $region78: #{tpu_custom_call.1} parent=1 // pred_check
      _
    $region79: #{tpu_custom_call.1} parent=1 // pred_check_branch
      %145 = sbr.rel (0) target = $region81
    $region80: #{tpu_custom_call.1} parent=1 // pred_region
      %146 = dma.done [#allocation3], 256
    $region81: #{tpu_custom_call.1} parent=1 // pred_fallthru
      _
    // Predicated region
    $region82: #{tpu_custom_call.1} parent=1 // pred_check
      _
    $region83: #{tpu_custom_call.1} parent=1 // pred_check_branch
      %148 = sbr.rel (0) target = $region85
    $region84: #{tpu_custom_call.1} parent=1 // pred_region
      %149 = dma.done [#allocation8], 3072
    $region85: #{tpu_custom_call.1} parent=1 // pred_fallthru
      _
    // Predicated region
    $region86: #{tpu_custom_call.1} parent=1 // pred_check
      _
    $region87: #{tpu_custom_call.1} parent=1 // pred_check_branch
      %151 = sbr.rel (0) target = $region89
    $region88: #{tpu_custom_call.1} parent=1 // pred_region
      %152 = dma.done [#allocation8], 1024
    $region89: #{tpu_custom_call.1} parent=1 // pred_fallthru
      _
    // Predicated region
    $region90: #{tpu_custom_call.1} parent=1 // pred_check
      _
    $region91: #{tpu_custom_call.1} parent=1 // pred_check_branch
      %154 = sbr.rel (0) target = $region93
    $region92: #{tpu_custom_call.1} parent=1 // pred_region
      %155 = dma.done [#allocation11], 4096
    $region93: #{tpu_custom_call.1} parent=1 // pred_fallthru
      _
    // Predicated region
    $region94: #{tpu_custom_call.1} parent=1 // pred_check
      _
    $region95: #{tpu_custom_call.1} parent=1 // pred_check_branch
      %157 = sbr.rel (0) target = $region97
    $region96: #{tpu_custom_call.1} parent=1 // pred_region
      %158 = dma.done [#allocation11], 4096
    $region97: #{tpu_custom_call.1} parent=1 // pred_fallthru
      _
    // Predicated region
    $region98: #{tpu_custom_call.1} parent=1 // pred_check
      _
    $region99: #{tpu_custom_call.1} parent=1 // pred_check_branch
      %160 = sbr.rel (0) target = $region101
    $region100: #{tpu_custom_call.1} parent=1 // pred_region
      %161 = dma.done [#allocation14], 1024
    $region101: #{tpu_custom_call.1} parent=1 // pred_fallthru
      _
    // Predicated region
    $region102: #{tpu_custom_call.1} parent=1 // pred_check
      _
    $region103: #{tpu_custom_call.1} parent=1 // pred_check_branch
      %163 = sbr.rel (0) target = $region105
    $region104: #{tpu_custom_call.1} parent=1 // pred_region
      %164 = dma.done [#allocation14], 1024
    $region105: #{tpu_custom_call.1} parent=1 // pred_fallthru
      _
    %165 = sfence
    %v167 = vld [vmem:[#allocation6] sm:$0xff]
    %v168 = vld [vmem:[#allocation6 + $0x8] sm:$0xff]
    %v169 = vpack.c.bf16 %v168, %v167
    %v170 = vld [vmem:[#allocation7] sm:$0xff]
    %v171 = vld [vmem:[#allocation7 + $0x8] sm:$0xf]
    %v172 = vld [vmem:[#allocation7 + $0xc] sm:$0xff]
    %v173 = vld [vmem:[#allocation7 + $0x14] sm:$0xf]
    %v174 = vld [vmem:[#allocation7 + $0x18] sm:$0xff]
    %v175 = vld [vmem:[#allocation7 + $0x20] sm:$0xf]
    %v176 = vld [vmem:[#allocation7 + $0x24] sm:$0xff]
    %v177 = vld [vmem:[#allocation7 + $0x2c] sm:$0xf]
    %v178 = vld [vmem:[#allocation7 + $0x30] sm:$0xff]
    %v179 = vld [vmem:[#allocation7 + $0x38] sm:$0xf]
    %v180 = vld [vmem:[#allocation7 + $0x3c] sm:$0xff]
    %v181 = vld [vmem:[#allocation7 + $0x44] sm:$0xf]
    %v182 = vld [vmem:[#allocation7 + $0x48] sm:$0xff]
    %v183 = vld [vmem:[#allocation7 + $0x50] sm:$0xf]
    %v184 = vld [vmem:[#allocation7 + $0x54] sm:$0xff]
    %v185 = vld [vmem:[#allocation7 + $0x5c] sm:$0xf]
    %v186 = vld [vmem:[#allocation7 + $0x60] sm:$0xff]
    %v187 = vld [vmem:[#allocation7 + $0x68] sm:$0xf]
    %v188 = vld [vmem:[#allocation7 + $0x6c] sm:$0xff]
    %v189 = vld [vmem:[#allocation7 + $0x74] sm:$0xf]
    %v190 = vld [vmem:[#allocation7 + $0x78] sm:$0xff]
    %v191 = vld [vmem:[#allocation7 + $0x80] sm:$0xf]
    %v192 = vld [vmem:[#allocation7 + $0x84] sm:$0xff]
    %v193 = vld [vmem:[#allocation7 + $0x8c] sm:$0xf]
    %v194 = vld [vmem:[#allocation7 + $0x90] sm:$0xff]
    %v195 = vld [vmem:[#allocation7 + $0x98] sm:$0xf]
    %v196 = vld [vmem:[#allocation7 + $0x9c] sm:$0xff]
    %v197 = vld [vmem:[#allocation7 + $0xa4] sm:$0xf]
    %v198 = vld [vmem:[#allocation7 + $0xa8] sm:$0xff]
    %v199 = vld [vmem:[#allocation7 + $0xb0] sm:$0xf]
    %v200 = vld [vmem:[#allocation7 + $0xb4] sm:$0xff]
    %v201 = vld [vmem:[#allocation7 + $0xbc] sm:$0xf]
    %v202 = vld [vmem:[%s3] sm:$0x7]
    %v204 = vlaneseq
    %v205 = vshrl.u32 %v204, 7
    %v206 = vsub.s32 0, %v205
    %v207 = vrot.slane %v202, %v206
    %v208 = vlaneseq
    %v209 = vshrl.u32 %v208, 7
    %v210 = vsub.s32 1, %v209
    %v211 = vrot.slane %v202, %v210
    %v212 = vlaneseq
    %v213 = vshrl.u32 %v212, 7
    %v214 = vsub.s32 2, %v213
    %v215 = vrot.slane %v202, %v214
    %v251 = vunpack.c.l.b16 %v170
    %v252 = vunpack.c.h.b16 %v170
    %v253 = vunpack.c.l.b16 %v171
    %v254 = vunpack.c.l.b16 %v172
    %v255 = vunpack.c.h.b16 %v172
    %v256 = vunpack.c.l.b16 %v173
    %v257 = vunpack.c.l.b16 %v174
    %v258 = vunpack.c.h.b16 %v174
    %v259 = vunpack.c.l.b16 %v175
    %v260 = vunpack.c.l.b16 %v176
    %v261 = vunpack.c.h.b16 %v176
    %v262 = vunpack.c.l.b16 %v177
    %v263 = vunpack.c.l.b16 %v178
    %v264 = vunpack.c.h.b16 %v178
    %v265 = vunpack.c.l.b16 %v179
    %v266 = vunpack.c.l.b16 %v180
    %v267 = vunpack.c.h.b16 %v180
    %v268 = vunpack.c.l.b16 %v181
    %v269 = vunpack.c.l.b16 %v182
    %v270 = vunpack.c.h.b16 %v182
    %v271 = vunpack.c.l.b16 %v183
    %v272 = vunpack.c.l.b16 %v184
    %v273 = vunpack.c.h.b16 %v184
    %v274 = vunpack.c.l.b16 %v185
    %v275 = vunpack.c.l.b16 %v186
    %v276 = vunpack.c.h.b16 %v186
    %v277 = vunpack.c.l.b16 %v187
    %v278 = vunpack.c.l.b16 %v188
    %v279 = vunpack.c.h.b16 %v188
    %v280 = vunpack.c.l.b16 %v189
    %v281 = vunpack.c.l.b16 %v190
    %v282 = vunpack.c.h.b16 %v190
    %v283 = vunpack.c.l.b16 %v191
    %v284 = vunpack.c.l.b16 %v192
    %v285 = vunpack.c.h.b16 %v192
    %v286 = vunpack.c.l.b16 %v193
    %v287 = vunpack.c.l.b16 %v194
    %v288 = vunpack.c.h.b16 %v194
    %v289 = vunpack.c.l.b16 %v195
    %v290 = vunpack.c.l.b16 %v196
    %v291 = vunpack.c.h.b16 %v196
    %v292 = vunpack.c.l.b16 %v197
    %v293 = vunpack.c.l.b16 %v198
    %v294 = vunpack.c.h.b16 %v198
    %v295 = vunpack.c.l.b16 %v199
    %v296 = vunpack.c.l.b16 %v200
    %v297 = vunpack.c.h.b16 %v200
    %v298 = vunpack.c.l.b16 %v201
    %v299 = vpack.c.b16 %v254, %v251
    %v300 = vpack.c.b16 %v255, %v252
    %v301 = vpack.c.b16 %v256, %v253
    %v302 = vpack.c.b16 %v260, %v257
    %v303 = vpack.c.b16 %v261, %v258
    %v304 = vpack.c.b16 %v262, %v259
    %v305 = vpack.c.b16 %v266, %v263
    %v306 = vpack.c.b16 %v267, %v264
    %v307 = vpack.c.b16 %v268, %v265
    %v308 = vpack.c.b16 %v272, %v269
    %v309 = vpack.c.b16 %v273, %v270
    %v310 = vpack.c.b16 %v274, %v271
    %v311 = vpack.c.b16 %v278, %v275
    %v312 = vpack.c.b16 %v279, %v276
    %v313 = vpack.c.b16 %v280, %v277
    %v314 = vpack.c.b16 %v284, %v281
    %v315 = vpack.c.b16 %v285, %v282
    %v316 = vpack.c.b16 %v286, %v283
    %v317 = vpack.c.b16 %v290, %v287
    %v318 = vpack.c.b16 %v291, %v288
    %v319 = vpack.c.b16 %v292, %v289
    %v320 = vpack.c.b16 %v296, %v293
    %v321 = vpack.c.b16 %v297, %v294
    %v322 = vpack.c.b16 %v298, %v295
    %347 = vmatprep.subr.bf16.mxu0 %v300
    %348 = vmatpush1.bf16.msra.mxu0 %v299
    %349 = vmatprep.subr.bf16.mxu0 %v303
    %350 = vmatpush1.bf16.msra.mxu0 %v302
    %351 = vmatprep.subr.bf16.mxu0 %v306
    %352 = vmatpush1.bf16.msra.mxu0 %v305
    %353 = vmatprep.subr.bf16.mxu0 %v309
    %354 = vmatpush1.bf16.msra.mxu0 %v308
    %355 = vmatprep.subr.bf16.mxu0 %v312
    %356 = vmatpush1.bf16.msra.mxu0 %v311
    %357 = vmatprep.subr.bf16.mxu0 %v315
    %358 = vmatpush1.bf16.msra.mxu0 %v314
    %359 = vmatprep.subr.bf16.mxu0 %v318
    %360 = vmatpush1.bf16.msra.mxu0 %v317
    %361 = vmatprep.subr.bf16.mxu0 %v321
    %362 = vmatpush1.bf16.msra.mxu0 %v320
    %363 = vmatprep.subr.bf16.mxu0 0
    %364 = vmatpush1.bf16.msra.mxu0 0
    %365 = vmatprep.subr.bf16.mxu0 0
    %366 = vmatpush1.bf16.msra.mxu0 0
    %367 = vmatprep.subr.bf16.mxu0 0
    %368 = vmatpush1.bf16.msra.mxu0 0
    %369 = vmatprep.subr.bf16.mxu0 0
    %370 = vmatpush1.bf16.msra.mxu0 0
    %371 = vmatprep.subr.bf16.mxu0 0
    %372 = vmatpush1.bf16.msra.mxu0 0
    %373 = vmatprep.subr.bf16.mxu0 0
    %374 = vmatpush1.bf16.msra.mxu0 0
    %375 = vmatprep.subr.bf16.mxu0 0
    %376 = vmatpush1.bf16.msra.mxu0 0
    %377 = vmatprep.subr.bf16.mxu0 0
    %378 = vmatpush1.bf16.msra.mxu0 0
    %379 = vmatprep.mubr.bf16.mxu0 0
    %380 = vmatmul.mubr.bf16.gmra.mrb[0].mxu0 %v169
    %v381 = vpop.f32.mrb[0].mxu0
    %v382 = vadd.f32 %v207, %v381
    %v383 = vpop.f32.mrb[0].mxu0
    %v384 = vadd.f32 %v211, %v383
    %v385 = vpop.f32.mrb[0].mxu0
    %v386 = vadd.f32 %v207, %v385
    %v387 = vpop.f32.mrb[0].mxu0
    %v388 = vadd.f32 %v211, %v387
    %389 = vdwg.mxu0
    %390 = vmatprep.subr.bf16.mxu0 0
    %391 = vmatpush1.bf16.msra.mxu0 %v301
    %392 = vmatprep.subr.bf16.mxu0 0
    %393 = vmatpush1.bf16.msra.mxu0 %v304
    %394 = vmatprep.subr.bf16.mxu0 0
    %395 = vmatpush1.bf16.msra.mxu0 %v307
    %396 = vmatprep.subr.bf16.mxu0 0
    %397 = vmatpush1.bf16.msra.mxu0 %v310
    %398 = vmatprep.subr.bf16.mxu0 0
    %399 = vmatpush1.bf16.msra.mxu0 %v313
    %400 = vmatprep.subr.bf16.mxu0 0
    %401 = vmatpush1.bf16.msra.mxu0 %v316
    %402 = vmatprep.subr.bf16.mxu0 0
    %403 = vmatpush1.bf16.msra.mxu0 %v319
    %404 = vmatprep.subr.bf16.mxu0 0
    %405 = vmatpush1.bf16.msra.mxu0 %v322
    %406 = vmatprep.subr.bf16.mxu0 0
    %407 = vmatpush1.bf16.msra.mxu0 0
    %408 = vmatprep.subr.bf16.mxu0 0
    %409 = vmatpush1.bf16.msra.mxu0 0
    %410 = vmatprep.subr.bf16.mxu0 0
    %411 = vmatpush1.bf16.msra.mxu0 0
    %412 = vmatprep.subr.bf16.mxu0 0
    %413 = vmatpush1.bf16.msra.mxu0 0
    %414 = vmatprep.subr.bf16.mxu0 0
    %415 = vmatpush1.bf16.msra.mxu0 0
    %416 = vmatprep.subr.bf16.mxu0 0
    %417 = vmatpush1.bf16.msra.mxu0 0
    %418 = vmatprep.subr.bf16.mxu0 0
    %419 = vmatpush1.bf16.msra.mxu0 0
    %420 = vmatprep.subr.bf16.mxu0 0
    %421 = vmatpush1.bf16.msra.mxu0 0
    %422 = vmatprep.mubr.bf16.mxu0 0
    %423 = vmatmul.mubr.bf16.gmra.mrb[0].mxu0 %v169
    %v424 = vpop.f32.mrb[0].mxu0
    %v425 = vadd.f32 %v215, %v424
    %v426 = vpop.f32.mrb[0].mxu0
    %v427 = vpop.f32.mrb[0].mxu0
    %v428 = vadd.f32 %v215, %v427
    %v429 = vpop.f32.mrb[0].mxu0
    %430 = vdwg.mxu0
    %v431 = vlaneseq
    %v432 = vand.u32 %v431, 127
    %s433 = sld [smem:[#allocation2]]
    %v434 = vstv %s433
    %vm435 = vcmp.lt.s32.totalorder %v432, %v434
    %v436 = vsel %vm435, 0.0, -1e+09
    %s437 = sld [smem:[#allocation2 + $0x1]]
    %v438 = vstv %s437
    %vm439 = vcmp.lt.s32.totalorder %v432, %v438
    %v440 = vsel %vm439, 0.0, -1e+09
    %v441 = vpack.c.bf16 %v382, %v382
    %v442 = vpack.c.bf16 %v386, %v386
    %v443 = vpack.c.bf16 %v384, %v384
    %v444 = vpack.c.bf16 %v388, %v388
    %445 = vmatprep.subr.bf16.mxu0 0
    %446 = vmatpush1.bf16.xpose.msra.mxu0 %v443
    %447 = vmatprep.subr.bf16.mxu0 0
    %448 = vmatpush1.bf16.xpose.msra.mxu0 0
    %449 = vmatprep.subr.bf16.mxu0 0
    %450 = vmatpush1.bf16.xpose.msra.mxu0 0
    %451 = vmatprep.subr.bf16.mxu0 0
    %452 = vmatpush1.bf16.xpose.msra.mxu0 0
    %453 = vmatprep.subr.bf16.mxu0 0
    %454 = vmatpush1.bf16.xpose.msra.mxu0 0
    %455 = vmatprep.subr.bf16.mxu0 0
    %456 = vmatpush1.bf16.xpose.msra.mxu0 0
    %457 = vmatprep.subr.bf16.mxu0 0
    %458 = vmatpush1.bf16.xpose.msra.mxu0 0
    %459 = vmatprep.subr.bf16.mxu0 0
    %460 = vmatpush1.bf16.xpose.msra.mxu0 0
    %461 = vmatprep.subr.bf16.mxu0 0
    %462 = vmatpush1.bf16.xpose.msra.mxu0 0
    %463 = vmatprep.subr.bf16.mxu0 0
    %464 = vmatpush1.bf16.xpose.msra.mxu0 0
    %465 = vmatprep.subr.bf16.mxu0 0
    %466 = vmatpush1.bf16.xpose.msra.mxu0 0
    %467 = vmatprep.subr.bf16.mxu0 0
    %468 = vmatpush1.bf16.xpose.msra.mxu0 0
    %469 = vmatprep.subr.bf16.mxu0 0
    %470 = vmatpush1.bf16.xpose.msra.mxu0 0
    %471 = vmatprep.subr.bf16.mxu0 0
    %472 = vmatpush1.bf16.xpose.msra.mxu0 0
    %473 = vmatprep.subr.bf16.mxu0 0
    %474 = vmatpush1.bf16.xpose.msra.mxu0 0
    %475 = vmatprep.subr.bf16.mxu0 0
    %476 = vmatpush1.bf16.xpose.msra.mxu0 0
    %477 = vmatprep.mubr.bf16.mxu0 0
    %478 = vmatmul.mubr.bf16.gmra.mrb[0].mxu0 %v441
    %v479 = vpop.f32.mrb[0].mxu0
    %v480 = vadd.f32 0.0, %v479
    %v481 = vpop.f32.mrb[0].mxu0
    %v482 = vpop.f32.mrb[0].mxu0
    %v483 = vpop.f32.mrb[0].mxu0
    %484 = vdwg.mxu0
    %485 = vmatprep.subr.bf16.mxu0 0
    %486 = vmatpush1.bf16.xpose.msra.mxu0 %v444
    %487 = vmatprep.subr.bf16.mxu0 0
    %488 = vmatpush1.bf16.xpose.msra.mxu0 0
    %489 = vmatprep.subr.bf16.mxu0 0
    %490 = vmatpush1.bf16.xpose.msra.mxu0 0
    %491 = vmatprep.subr.bf16.mxu0 0
    %492 = vmatpush1.bf16.xpose.msra.mxu0 0
    %493 = vmatprep.subr.bf16.mxu0 0
    %494 = vmatpush1.bf16.xpose.msra.mxu0 0
    %495 = vmatprep.subr.bf16.mxu0 0
    %496 = vmatpush1.bf16.xpose.msra.mxu0 0
    %497 = vmatprep.subr.bf16.mxu0 0
    %498 = vmatpush1.bf16.xpose.msra.mxu0 0
    %499 = vmatprep.subr.bf16.mxu0 0
    %500 = vmatpush1.bf16.xpose.msra.mxu0 0
    %501 = vmatprep.subr.bf16.mxu0 0
    %502 = vmatpush1.bf16.xpose.msra.mxu0 0
    %503 = vmatprep.subr.bf16.mxu0 0
    %504 = vmatpush1.bf16.xpose.msra.mxu0 0
    %505 = vmatprep.subr.bf16.mxu0 0
    %506 = vmatpush1.bf16.xpose.msra.mxu0 0
    %507 = vmatprep.subr.bf16.mxu0 0
    %508 = vmatpush1.bf16.xpose.msra.mxu0 0
    %509 = vmatprep.subr.bf16.mxu0 0
    %510 = vmatpush1.bf16.xpose.msra.mxu0 0
    %511 = vmatprep.subr.bf16.mxu0 0
    %512 = vmatpush1.bf16.xpose.msra.mxu0 0
    %513 = vmatprep.subr.bf16.mxu0 0
    %514 = vmatpush1.bf16.xpose.msra.mxu0 0
    %515 = vmatprep.subr.bf16.mxu0 0
    %516 = vmatpush1.bf16.xpose.msra.mxu0 0
    %517 = vmatprep.mubr.bf16.mxu0 0
    %518 = vmatmul.mubr.bf16.gmra.mrb[0].mxu0 %v442
    %v519 = vpop.f32.mrb[0].mxu0
    %v520 = vadd.f32 0.0, %v519
    %v521 = vpop.f32.mrb[0].mxu0
    %v522 = vpop.f32.mrb[0].mxu0
    %v523 = vpop.f32.mrb[0].mxu0
    %524 = vdwg.mxu0
    %v525 = vmul.f32 %v480, 0.088388346
    %v526 = vmul.f32 %v520, 0.088388346
    %v527 = vadd.f32 %v525, %v436
    %v528 = vadd.f32 %v526, %v440
    %vm529 = vcmask 64512
    %v530 = vsel %vm529, %v527, -inf
    %531 = vmax.xlane.f32.xlu0 %v530
    %v532 = vpop.xlane.xlu0 %531
    %v533 = vsel %vm529, %v528, -inf
    %534 = vmax.xlane.f32.xlu0 %v533
    %v535 = vpop.xlane.xlu0 %534
    %v536 = vsub.f32 %v527, %v532
    %v537 = vsub.f32 %v528, %v535
    %v538 = vmul.f32 %v536, 1.442695
    %v539 = vpow.pop %v538
    %v540 = vmul.f32 %v537, 1.442695
    %v541 = vpow.pop %v540
    %v542 = vsel %vm529, %v539, 0.0
    %543 = vadd.xlane.f32.xlu0 %v542
    %v544 = vpop.xlane.xlu0 %543
    %v545 = vsel %vm529, %v541, 0.0
    %546 = vadd.xlane.f32.xlu0 %v545
    %v547 = vpop.xlane.xlu0 %546
    %v548 = vrcp.pop %v544
    %v549 = vrcp.pop %v547
    %v550 = vmul.f32 %v539, %v548
    %v551 = vmul.f32 %v541, %v549
    %v552 = vpack.c.bf16 %v550, %v550
    %v553 = vpack.c.bf16 %v551, %v551
    %v554 = vpack.c.bf16 %v425, %v425
    %v555 = vpack.c.bf16 %v428, %v428
    %v557 = vsel %vm529, %v552, 0
    %vm559 = vcmask 1043456
    %v561 = vsel %vm559, %v554, 0
    %563 = vmatprep.subr.bf16.mxu0 0
    %564 = vmatpush1.bf16.msra.mxu0 %v561
    %565 = vmatprep.subr.bf16.mxu0 0
    %566 = vmatpush1.bf16.msra.mxu0 0
    %567 = vmatprep.subr.bf16.mxu0 0
    %568 = vmatpush1.bf16.msra.mxu0 0
    %569 = vmatprep.subr.bf16.mxu0 0
    %570 = vmatpush1.bf16.msra.mxu0 0
    %571 = vmatprep.subr.bf16.mxu0 0
    %572 = vmatpush1.bf16.msra.mxu0 0
    %573 = vmatprep.subr.bf16.mxu0 0
    %574 = vmatpush1.bf16.msra.mxu0 0
    %575 = vmatprep.subr.bf16.mxu0 0
    %576 = vmatpush1.bf16.msra.mxu0 0
    %577 = vmatprep.subr.bf16.mxu0 0
    %578 = vmatpush1.bf16.msra.mxu0 0
    %579 = vmatprep.subr.bf16.mxu0 0
    %580 = vmatpush1.bf16.msra.mxu0 0
    %581 = vmatprep.subr.bf16.mxu0 0
    %582 = vmatpush1.bf16.msra.mxu0 0
    %583 = vmatprep.subr.bf16.mxu0 0
    %584 = vmatpush1.bf16.msra.mxu0 0
    %585 = vmatprep.subr.bf16.mxu0 0
    %586 = vmatpush1.bf16.msra.mxu0 0
    %587 = vmatprep.subr.bf16.mxu0 0
    %588 = vmatpush1.bf16.msra.mxu0 0
    %589 = vmatprep.subr.bf16.mxu0 0
    %590 = vmatpush1.bf16.msra.mxu0 0
    %591 = vmatprep.subr.bf16.mxu0 0
    %592 = vmatpush1.bf16.msra.mxu0 0
    %593 = vmatprep.subr.bf16.mxu0 0
    %594 = vmatpush1.bf16.msra.mxu0 0
    %595 = vmatprep.mubr.bf16.mxu0 0
    %596 = vmatmul.mubr.bf16.gmra.mrb[0].mxu0 %v557
    %v597 = vpop.f32.mrb[0].mxu0
    %v598 = vadd.f32 0.0, %v597
    %v599 = vpop.f32.mrb[0].mxu0
    %v600 = vpop.f32.mrb[0].mxu0
    %v601 = vpop.f32.mrb[0].mxu0
    %602 = vdwg.mxu0
    %v604 = vsel %vm529, %v553, 0
    %v607 = vsel %vm559, %v555, 0
    %609 = vmatprep.subr.bf16.mxu0 0
    %610 = vmatpush1.bf16.msra.mxu0 %v607
    %611 = vmatprep.subr.bf16.mxu0 0
    %612 = vmatpush1.bf16.msra.mxu0 0
    %613 = vmatprep.subr.bf16.mxu0 0
    %614 = vmatpush1.bf16.msra.mxu0 0
    %615 = vmatprep.subr.bf16.mxu0 0
    %616 = vmatpush1.bf16.msra.mxu0 0
    %617 = vmatprep.subr.bf16.mxu0 0
    %618 = vmatpush1.bf16.msra.mxu0 0
    %619 = vmatprep.subr.bf16.mxu0 0
    %620 = vmatpush1.bf16.msra.mxu0 0
    %621 = vmatprep.subr.bf16.mxu0 0
    %622 = vmatpush1.bf16.msra.mxu0 0
    %623 = vmatprep.subr.bf16.mxu0 0
    %624 = vmatpush1.bf16.msra.mxu0 0
    %625 = vmatprep.subr.bf16.mxu0 0
    %626 = vmatpush1.bf16.msra.mxu0 0
    %627 = vmatprep.subr.bf16.mxu0 0
    %628 = vmatpush1.bf16.msra.mxu0 0
    %629 = vmatprep.subr.bf16.mxu0 0
    %630 = vmatpush1.bf16.msra.mxu0 0
    %631 = vmatprep.subr.bf16.mxu0 0
    %632 = vmatpush1.bf16.msra.mxu0 0
    %633 = vmatprep.subr.bf16.mxu0 0
    %634 = vmatpush1.bf16.msra.mxu0 0
    %635 = vmatprep.subr.bf16.mxu0 0
    %636 = vmatpush1.bf16.msra.mxu0 0
    %637 = vmatprep.subr.bf16.mxu0 0
    %638 = vmatpush1.bf16.msra.mxu0 0
    %639 = vmatprep.subr.bf16.mxu0 0
    %640 = vmatpush1.bf16.msra.mxu0 0
    %641 = vmatprep.mubr.bf16.mxu0 0
    %642 = vmatmul.mubr.bf16.gmra.mrb[0].mxu0 %v604
    %v643 = vpop.f32.mrb[0].mxu0
    %v644 = vadd.f32 0.0, %v643
    %v645 = vpop.f32.mrb[0].mxu0
    %v646 = vpop.f32.mrb[0].mxu0
    %v647 = vpop.f32.mrb[0].mxu0
    %648 = vdwg.mxu0
    %v649 = vpack.c.bf16 %v644, %v598
    %v650 = vld [vmem:[#allocation9] sm:$0xf]
    %v651 = vld [vmem:[#allocation9 + $0x4] sm:$0xf]
    %v652 = vld [vmem:[#allocation9 + $0x8] sm:$0xf]
    %v653 = vld [vmem:[#allocation9 + $0xc] sm:$0xf]
    %v654 = vld [vmem:[#allocation9 + $0x10] sm:$0xf]
    %v655 = vld [vmem:[#allocation9 + $0x14] sm:$0xf]
    %v656 = vld [vmem:[#allocation9 + $0x18] sm:$0xf]
    %v657 = vld [vmem:[#allocation9 + $0x1c] sm:$0xf]
    %v658 = vld [vmem:[#allocation9 + $0x20] sm:$0xf]
    %v659 = vld [vmem:[#allocation9 + $0x24] sm:$0xf]
    %v660 = vld [vmem:[#allocation9 + $0x28] sm:$0xf]
    %v661 = vld [vmem:[#allocation9 + $0x2c] sm:$0xf]
    %v662 = vld [vmem:[#allocation9 + $0x30] sm:$0xf]
    %v663 = vld [vmem:[#allocation9 + $0x34] sm:$0xf]
    %v664 = vld [vmem:[#allocation9 + $0x38] sm:$0xf]
    %v665 = vld [vmem:[#allocation9 + $0x3c] sm:$0xf]
    %v666 = vld [vmem:[%s5] sm:$0x1]
    %v668 = vlaneseq
    %v669 = vshrl.u32 %v668, 7
    %v670 = vsub.s32 0, %v669
    %v671 = vrot.slane %v666, %v670
    %v689 = vunpack.c.l.b16 %v650
    %v690 = vunpack.c.l.b16 %v651
    %v691 = vunpack.c.l.b16 %v652
    %v692 = vunpack.c.l.b16 %v653
    %v693 = vunpack.c.l.b16 %v654
    %v694 = vunpack.c.l.b16 %v655
    %v695 = vunpack.c.l.b16 %v656
    %v696 = vunpack.c.l.b16 %v657
    %v697 = vunpack.c.l.b16 %v658
    %v698 = vunpack.c.l.b16 %v659
    %v699 = vunpack.c.l.b16 %v660
    %v700 = vunpack.c.l.b16 %v661
    %v701 = vunpack.c.l.b16 %v662
    %v702 = vunpack.c.l.b16 %v663
    %v703 = vunpack.c.l.b16 %v664
    %v704 = vunpack.c.l.b16 %v665
    %v705 = vpack.c.b16 %v690, %v689
    %v706 = vpack.c.b16 %v692, %v691
    %v707 = vpack.c.b16 %v694, %v693
    %v708 = vpack.c.b16 %v696, %v695
    %v709 = vpack.c.b16 %v698, %v697
    %v710 = vpack.c.b16 %v700, %v699
    %v711 = vpack.c.b16 %v702, %v701
    %v712 = vpack.c.b16 %v704, %v703
    %721 = vmatprep.subr.bf16.mxu0 0
    %722 = vmatpush1.bf16.msra.mxu0 %v705
    %723 = vmatprep.subr.bf16.mxu0 0
    %724 = vmatpush1.bf16.msra.mxu0 %v706
    %725 = vmatprep.subr.bf16.mxu0 0
    %726 = vmatpush1.bf16.msra.mxu0 %v707
    %727 = vmatprep.subr.bf16.mxu0 0
    %728 = vmatpush1.bf16.msra.mxu0 %v708
    %729 = vmatprep.subr.bf16.mxu0 0
    %730 = vmatpush1.bf16.msra.mxu0 %v709
    %731 = vmatprep.subr.bf16.mxu0 0
    %732 = vmatpush1.bf16.msra.mxu0 %v710
    %733 = vmatprep.subr.bf16.mxu0 0
    %734 = vmatpush1.bf16.msra.mxu0 %v711
    %735 = vmatprep.subr.bf16.mxu0 0
    %736 = vmatpush1.bf16.msra.mxu0 %v712
    %737 = vmatprep.subr.bf16.mxu0 0
    %738 = vmatpush1.bf16.msra.mxu0 0
    %739 = vmatprep.subr.bf16.mxu0 0
    %740 = vmatpush1.bf16.msra.mxu0 0
    %741 = vmatprep.subr.bf16.mxu0 0
    %742 = vmatpush1.bf16.msra.mxu0 0
    %743 = vmatprep.subr.bf16.mxu0 0
    %744 = vmatpush1.bf16.msra.mxu0 0
    %745 = vmatprep.subr.bf16.mxu0 0
    %746 = vmatpush1.bf16.msra.mxu0 0
    %747 = vmatprep.subr.bf16.mxu0 0
    %748 = vmatpush1.bf16.msra.mxu0 0
    %749 = vmatprep.subr.bf16.mxu0 0
    %750 = vmatpush1.bf16.msra.mxu0 0
    %751 = vmatprep.subr.bf16.mxu0 0
    %752 = vmatpush1.bf16.msra.mxu0 0
    %753 = vmatprep.mubr.bf16.mxu0 0
    %754 = vmatmul.mubr.bf16.gmra.mrb[0].mxu0 %v649
    %v755 = vpop.f32.mrb[0].mxu0
    %v756 = vadd.f32 %v671, %v755
    %v757 = vpop.f32.mrb[0].mxu0
    %v758 = vpop.f32.mrb[0].mxu0
    %v759 = vadd.f32 %v671, %v758
    %v760 = vpop.f32.mrb[0].mxu0
    %761 = vdwg.mxu0
    %v762 = vadd.f32 %v167, %v756
    %v763 = vadd.f32 %v168, %v759
    %v764 = vld [vmem:[%s6] sm:$0x1]
    %v765 = vld [vmem:[%s7] sm:$0x1]
    %766 = vadd.xlane.f32.xlu0 %v762
    %v767 = vpop.xlane.xlu0 %766
    %768 = vadd.xlane.f32.xlu0 %v763
    %v769 = vpop.xlane.xlu0 %768
    %v770 = vrcp.pop 128.0
    %v771 = vmul.f32 %v767, %v770
    %v772 = vmul.f32 %v769, %v770
    %v773 = vsub.f32 %v762, %v771
    %v774 = vsub.f32 %v763, %v772
    %v775 = vmul.f32 %v773, %v773
    %v776 = vmul.f32 %v774, %v774
    %777 = vadd.xlane.f32.xlu0 %v775
    %v778 = vpop.xlane.xlu0 %777
    %779 = vadd.xlane.f32.xlu0 %v776
    %v780 = vpop.xlane.xlu0 %779
    %v781 = vmul.f32 %v778, %v770
    %v782 = vmul.f32 %v780, %v770
    %v783 = vadd.f32 %v781, 1e-12
    %v784 = vadd.f32 %v782, 1e-12
    %v785 = vrsqrt.pop %v783
    %v786 = vrsqrt.pop %v784
    %v787 = vmul.f32 %v773, %v785
    %v788 = vmul.f32 %v774, %v786
    %v790 = vlaneseq
    %v791 = vshrl.u32 %v790, 7
    %v792 = vsub.s32 0, %v791
    %v793 = vrot.slane %v764, %v792
    %v795 = vmul.f32 %v787, %v793
    %v796 = vmul.f32 %v788, %v793
    %v798 = vlaneseq
    %v799 = vshrl.u32 %v798, 7
    %v800 = vsub.s32 0, %v799
    %v801 = vrot.slane %v765, %v800
    %v803 = vadd.f32 %v795, %v801
    %v804 = vadd.f32 %v796, %v801
    %v805 = vpack.c.bf16 %v804, %v803
    %v806 = vld [vmem:[#allocation10] sm:$0xff]
    %v807 = vld [vmem:[#allocation10 + $0x8] sm:$0xff]
    %v808 = vld [vmem:[#allocation10 + $0x10] sm:$0xff]
    %v809 = vld [vmem:[#allocation10 + $0x18] sm:$0xff]
    %v810 = vld [vmem:[#allocation10 + $0x20] sm:$0xff]
    %v811 = vld [vmem:[#allocation10 + $0x28] sm:$0xff]
    %v812 = vld [vmem:[#allocation10 + $0x30] sm:$0xff]
    %v813 = vld [vmem:[#allocation10 + $0x38] sm:$0xff]
    %v814 = vld [vmem:[#allocation10 + $0x40] sm:$0xff]
    %v815 = vld [vmem:[#allocation10 + $0x48] sm:$0xff]
    %v816 = vld [vmem:[#allocation10 + $0x50] sm:$0xff]
    %v817 = vld [vmem:[#allocation10 + $0x58] sm:$0xff]
    %v818 = vld [vmem:[#allocation10 + $0x60] sm:$0xff]
    %v819 = vld [vmem:[#allocation10 + $0x68] sm:$0xff]
    %v820 = vld [vmem:[#allocation10 + $0x70] sm:$0xff]
    %v821 = vld [vmem:[#allocation10 + $0x78] sm:$0xff]
    %v822 = vld [vmem:[#allocation10 + $0x80] sm:$0xff]
    %v823 = vld [vmem:[#allocation10 + $0x88] sm:$0xff]
    %v824 = vld [vmem:[#allocation10 + $0x90] sm:$0xff]
    %v825 = vld [vmem:[#allocation10 + $0x98] sm:$0xff]
    %v826 = vld [vmem:[#allocation10 + $0xa0] sm:$0xff]
    %v827 = vld [vmem:[#allocation10 + $0xa8] sm:$0xff]
    %v828 = vld [vmem:[#allocation10 + $0xb0] sm:$0xff]
    %v829 = vld [vmem:[#allocation10 + $0xb8] sm:$0xff]
    %v830 = vld [vmem:[#allocation10 + $0xc0] sm:$0xff]
    %v831 = vld [vmem:[#allocation10 + $0xc8] sm:$0xff]
    %v832 = vld [vmem:[#allocation10 + $0xd0] sm:$0xff]
    %v833 = vld [vmem:[#allocation10 + $0xd8] sm:$0xff]
    %v834 = vld [vmem:[#allocation10 + $0xe0] sm:$0xff]
    %v835 = vld [vmem:[#allocation10 + $0xe8] sm:$0xff]
    %v836 = vld [vmem:[#allocation10 + $0xf0] sm:$0xff]
    %v837 = vld [vmem:[#allocation10 + $0xf8] sm:$0xff]
    %v838 = vld [vmem:[%s9] sm:$0xf]
    %v840 = vlaneseq
    %v841 = vshrl.u32 %v840, 7
    %v842 = vsub.s32 0, %v841
    %v843 = vrot.slane %v838, %v842
    %v844 = vlaneseq
    %v845 = vshrl.u32 %v844, 7
    %v846 = vsub.s32 1, %v845
    %v847 = vrot.slane %v838, %v846
    %v848 = vlaneseq
    %v849 = vshrl.u32 %v848, 7
    %v850 = vsub.s32 2, %v849
    %v851 = vrot.slane %v838, %v850
    %v852 = vlaneseq
    %v853 = vshrl.u32 %v852, 7
    %v854 = vsub.s32 3, %v853
    %v855 = vrot.slane %v838, %v854
    %v892 = vunpack.c.l.b16 %v806
    %v893 = vunpack.c.h.b16 %v806
    %v894 = vunpack.c.l.b16 %v807
    %v895 = vunpack.c.h.b16 %v807
    %v896 = vunpack.c.l.b16 %v808
    %v897 = vunpack.c.h.b16 %v808
    %v898 = vunpack.c.l.b16 %v809
    %v899 = vunpack.c.h.b16 %v809
    %v900 = vunpack.c.l.b16 %v810
    %v901 = vunpack.c.h.b16 %v810
    %v902 = vunpack.c.l.b16 %v811
    %v903 = vunpack.c.h.b16 %v811
    %v904 = vunpack.c.l.b16 %v812
    %v905 = vunpack.c.h.b16 %v812
    %v906 = vunpack.c.l.b16 %v813
    %v907 = vunpack.c.h.b16 %v813
    %v908 = vunpack.c.l.b16 %v814
    %v909 = vunpack.c.h.b16 %v814
    %v910 = vunpack.c.l.b16 %v815
    %v911 = vunpack.c.h.b16 %v815
    %v912 = vunpack.c.l.b16 %v816
    %v913 = vunpack.c.h.b16 %v816
    %v914 = vunpack.c.l.b16 %v817
    %v915 = vunpack.c.h.b16 %v817
    %v916 = vunpack.c.l.b16 %v818
    %v917 = vunpack.c.h.b16 %v818
    %v918 = vunpack.c.l.b16 %v819
    %v919 = vunpack.c.h.b16 %v819
    %v920 = vunpack.c.l.b16 %v820
    %v921 = vunpack.c.h.b16 %v820
    %v922 = vunpack.c.l.b16 %v821
    %v923 = vunpack.c.h.b16 %v821
    %v924 = vunpack.c.l.b16 %v822
    %v925 = vunpack.c.h.b16 %v822
    %v926 = vunpack.c.l.b16 %v823
    %v927 = vunpack.c.h.b16 %v823
    %v928 = vunpack.c.l.b16 %v824
    %v929 = vunpack.c.h.b16 %v824
    %v930 = vunpack.c.l.b16 %v825
    %v931 = vunpack.c.h.b16 %v825
    %v932 = vunpack.c.l.b16 %v826
    %v933 = vunpack.c.h.b16 %v826
    %v934 = vunpack.c.l.b16 %v827
    %v935 = vunpack.c.h.b16 %v827
    %v936 = vunpack.c.l.b16 %v828
    %v937 = vunpack.c.h.b16 %v828
    %v938 = vunpack.c.l.b16 %v829
    %v939 = vunpack.c.h.b16 %v829
    %v940 = vunpack.c.l.b16 %v830
    %v941 = vunpack.c.h.b16 %v830
    %v942 = vunpack.c.l.b16 %v831
    %v943 = vunpack.c.h.b16 %v831
    %v944 = vunpack.c.l.b16 %v832
    %v945 = vunpack.c.h.b16 %v832
    %v946 = vunpack.c.l.b16 %v833
    %v947 = vunpack.c.h.b16 %v833
    %v948 = vunpack.c.l.b16 %v834
    %v949 = vunpack.c.h.b16 %v834
    %v950 = vunpack.c.l.b16 %v835
    %v951 = vunpack.c.h.b16 %v835
    %v952 = vunpack.c.l.b16 %v836
    %v953 = vunpack.c.h.b16 %v836
    %v954 = vunpack.c.l.b16 %v837
    %v955 = vunpack.c.h.b16 %v837
    %v956 = vpack.c.b16 %v896, %v892
    %v957 = vpack.c.b16 %v897, %v893
    %v958 = vpack.c.b16 %v898, %v894
    %v959 = vpack.c.b16 %v899, %v895
    %v960 = vpack.c.b16 %v904, %v900
    %v961 = vpack.c.b16 %v905, %v901
    %v962 = vpack.c.b16 %v906, %v902
    %v963 = vpack.c.b16 %v907, %v903
    %v964 = vpack.c.b16 %v912, %v908
    %v965 = vpack.c.b16 %v913, %v909
    %v966 = vpack.c.b16 %v914, %v910
    %v967 = vpack.c.b16 %v915, %v911
    %v968 = vpack.c.b16 %v920, %v916
    %v969 = vpack.c.b16 %v921, %v917
    %v970 = vpack.c.b16 %v922, %v918
    %v971 = vpack.c.b16 %v923, %v919
    %v972 = vpack.c.b16 %v928, %v924
    %v973 = vpack.c.b16 %v929, %v925
    %v974 = vpack.c.b16 %v930, %v926
    %v975 = vpack.c.b16 %v931, %v927
    %v976 = vpack.c.b16 %v936, %v932
    %v977 = vpack.c.b16 %v937, %v933
    %v978 = vpack.c.b16 %v938, %v934
    %v979 = vpack.c.b16 %v939, %v935
    %v980 = vpack.c.b16 %v944, %v940
    %v981 = vpack.c.b16 %v945, %v941
    %v982 = vpack.c.b16 %v946, %v942
    %v983 = vpack.c.b16 %v947, %v943
    %v984 = vpack.c.b16 %v952, %v948
    %v985 = vpack.c.b16 %v953, %v949
    %v986 = vpack.c.b16 %v954, %v950
    %v987 = vpack.c.b16 %v955, %v951
    %1020 = vmatprep.subr.bf16.mxu0 %v957
    %1021 = vmatpush1.bf16.msra.mxu0 %v956
    %1022 = vmatprep.subr.bf16.mxu0 %v961
    %1023 = vmatpush1.bf16.msra.mxu0 %v960
    %1024 = vmatprep.subr.bf16.mxu0 %v965
    %1025 = vmatpush1.bf16.msra.mxu0 %v964
    %1026 = vmatprep.subr.bf16.mxu0 %v969
    %1027 = vmatpush1.bf16.msra.mxu0 %v968
    %1028 = vmatprep.subr.bf16.mxu0 %v973
    %1029 = vmatpush1.bf16.msra.mxu0 %v972
    %1030 = vmatprep.subr.bf16.mxu0 %v977
    %1031 = vmatpush1.bf16.msra.mxu0 %v976
    %1032 = vmatprep.subr.bf16.mxu0 %v981
    %1033 = vmatpush1.bf16.msra.mxu0 %v980
    %1034 = vmatprep.subr.bf16.mxu0 %v985
    %1035 = vmatpush1.bf16.msra.mxu0 %v984
    %1036 = vmatprep.subr.bf16.mxu0 0
    %1037 = vmatpush1.bf16.msra.mxu0 0
    %1038 = vmatprep.subr.bf16.mxu0 0
    %1039 = vmatpush1.bf16.msra.mxu0 0
    %1040 = vmatprep.subr.bf16.mxu0 0
    %1041 = vmatpush1.bf16.msra.mxu0 0
    %1042 = vmatprep.subr.bf16.mxu0 0
    %1043 = vmatpush1.bf16.msra.mxu0 0
    %1044 = vmatprep.subr.bf16.mxu0 0
    %1045 = vmatpush1.bf16.msra.mxu0 0
    %1046 = vmatprep.subr.bf16.mxu0 0
    %1047 = vmatpush1.bf16.msra.mxu0 0
    %1048 = vmatprep.subr.bf16.mxu0 0
    %1049 = vmatpush1.bf16.msra.mxu0 0
    %1050 = vmatprep.subr.bf16.mxu0 0
    %1051 = vmatpush1.bf16.msra.mxu0 0
    %1052 = vmatprep.mubr.bf16.mxu0 0
    %1053 = vmatmul.mubr.bf16.gmra.mrb[0].mxu0 %v805
    %v1054 = vpop.f32.mrb[0].mxu0
    %v1055 = vadd.f32 %v843, %v1054
    %v1056 = vpop.f32.mrb[0].mxu0
    %v1057 = vadd.f32 %v847, %v1056
    %v1058 = vpop.f32.mrb[0].mxu0
    %v1059 = vadd.f32 %v843, %v1058
    %v1060 = vpop.f32.mrb[0].mxu0
    %v1061 = vadd.f32 %v847, %v1060
    %1062 = vdwg.mxu0
    %1063 = vmatprep.subr.bf16.mxu0 %v959
    %1064 = vmatpush1.bf16.msra.mxu0 %v958
    %1065 = vmatprep.subr.bf16.mxu0 %v963
    %1066 = vmatpush1.bf16.msra.mxu0 %v962
    %1067 = vmatprep.subr.bf16.mxu0 %v967
    %1068 = vmatpush1.bf16.msra.mxu0 %v966
    %1069 = vmatprep.subr.bf16.mxu0 %v971
    %1070 = vmatpush1.bf16.msra.mxu0 %v970
    %1071 = vmatprep.subr.bf16.mxu0 %v975
    %1072 = vmatpush1.bf16.msra.mxu0 %v974
    %1073 = vmatprep.subr.bf16.mxu0 %v979
    %1074 = vmatpush1.bf16.msra.mxu0 %v978
    %1075 = vmatprep.subr.bf16.mxu0 %v983
    %1076 = vmatpush1.bf16.msra.mxu0 %v982
    %1077 = vmatprep.subr.bf16.mxu0 %v987
    %1078 = vmatpush1.bf16.msra.mxu0 %v986
    %1079 = vmatprep.subr.bf16.mxu0 0
    %1080 = vmatpush1.bf16.msra.mxu0 0
    %1081 = vmatprep.subr.bf16.mxu0 0
    %1082 = vmatpush1.bf16.msra.mxu0 0
    %1083 = vmatprep.subr.bf16.mxu0 0
    %1084 = vmatpush1.bf16.msra.mxu0 0
    %1085 = vmatprep.subr.bf16.mxu0 0
    %1086 = vmatpush1.bf16.msra.mxu0 0
    %1087 = vmatprep.subr.bf16.mxu0 0
    %1088 = vmatpush1.bf16.msra.mxu0 0
    %1089 = vmatprep.subr.bf16.mxu0 0
    %1090 = vmatpush1.bf16.msra.mxu0 0
    %1091 = vmatprep.subr.bf16.mxu0 0
    %1092 = vmatpush1.bf16.msra.mxu0 0
    %1093 = vmatprep.subr.bf16.mxu0 0
    %1094 = vmatpush1.bf16.msra.mxu0 0
    %1095 = vmatprep.mubr.bf16.mxu0 0
    %1096 = vmatmul.mubr.bf16.gmra.mrb[0].mxu0 %v805
    %v1097 = vpop.f32.mrb[0].mxu0
    %v1098 = vadd.f32 %v851, %v1097
    %v1099 = vpop.f32.mrb[0].mxu0
    %v1100 = vadd.f32 %v855, %v1099
    %v1101 = vpop.f32.mrb[0].mxu0
    %v1102 = vadd.f32 %v851, %v1101
    %v1103 = vpop.f32.mrb[0].mxu0
    %v1104 = vadd.f32 %v855, %v1103
    %1105 = vdwg.mxu0
    %v1106 = vmul.f32 %v1055, %v1055
    %v1107 = vmul.f32 %v1057, %v1057
    %v1108 = vmul.f32 %v1098, %v1098
    %v1109 = vmul.f32 %v1100, %v1100
    %v1110 = vmul.f32 %v1059, %v1059
    %v1111 = vmul.f32 %v1061, %v1061
    %v1112 = vmul.f32 %v1102, %v1102
    %v1113 = vmul.f32 %v1104, %v1104
    %v1114 = vmul.f32 %v1055, %v1106
    %v1115 = vmul.f32 %v1057, %v1107
    %v1116 = vmul.f32 %v1098, %v1108
    %v1117 = vmul.f32 %v1100, %v1109
    %v1118 = vmul.f32 %v1059, %v1110
    %v1119 = vmul.f32 %v1061, %v1111
    %v1120 = vmul.f32 %v1102, %v1112
    %v1121 = vmul.f32 %v1104, %v1113
    %v1122 = vmul.f32 %v1114, 0.044715
    %v1123 = vmul.f32 %v1115, 0.044715
    %v1124 = vmul.f32 %v1116, 0.044715
    %v1125 = vmul.f32 %v1117, 0.044715
    %v1126 = vmul.f32 %v1118, 0.044715
    %v1127 = vmul.f32 %v1119, 0.044715
    %v1128 = vmul.f32 %v1120, 0.044715
    %v1129 = vmul.f32 %v1121, 0.044715
    %v1130 = vadd.f32 %v1055, %v1122
    %v1131 = vadd.f32 %v1057, %v1123
    %v1132 = vadd.f32 %v1098, %v1124
    %v1133 = vadd.f32 %v1100, %v1125
    %v1134 = vadd.f32 %v1059, %v1126
    %v1135 = vadd.f32 %v1061, %v1127
    %v1136 = vadd.f32 %v1102, %v1128
    %v1137 = vadd.f32 %v1104, %v1129
    %v1138 = vmul.f32 %v1130, 0.7978846
    %v1139 = vmul.f32 %v1131, 0.7978846
    %v1140 = vmul.f32 %v1132, 0.7978846
    %v1141 = vmul.f32 %v1133, 0.7978846
    %v1142 = vmul.f32 %v1134, 0.7978846
    %v1143 = vmul.f32 %v1135, 0.7978846
    %v1144 = vmul.f32 %v1136, 0.7978846
    %v1145 = vmul.f32 %v1137, 0.7978846
    %v1146 = vtanh.pop %v1138
    %v1147 = vtanh.pop %v1139
    %v1148 = vtanh.pop %v1140
    %v1149 = vtanh.pop %v1141
    %v1150 = vtanh.pop %v1142
    %v1151 = vtanh.pop %v1143
    %v1152 = vtanh.pop %v1144
    %v1153 = vtanh.pop %v1145
    %v1154 = vadd.f32 %v1146, 1.0
    %v1155 = vadd.f32 %v1147, 1.0
    %v1156 = vadd.f32 %v1148, 1.0
    %v1157 = vadd.f32 %v1149, 1.0
    %v1158 = vadd.f32 %v1150, 1.0
    %v1159 = vadd.f32 %v1151, 1.0
    %v1160 = vadd.f32 %v1152, 1.0
    %v1161 = vadd.f32 %v1153, 1.0
    %v1162 = vmul.f32 %v1154, 0.5
    %v1163 = vmul.f32 %v1155, 0.5
    %v1164 = vmul.f32 %v1156, 0.5
    %v1165 = vmul.f32 %v1157, 0.5
    %v1166 = vmul.f32 %v1158, 0.5
    %v1167 = vmul.f32 %v1159, 0.5
    %v1168 = vmul.f32 %v1160, 0.5
    %v1169 = vmul.f32 %v1161, 0.5
    %v1170 = vmul.f32 %v1055, %v1162
    %v1171 = vmul.f32 %v1057, %v1163
    %v1172 = vmul.f32 %v1098, %v1164
    %v1173 = vmul.f32 %v1100, %v1165
    %v1174 = vmul.f32 %v1059, %v1166
    %v1175 = vmul.f32 %v1061, %v1167
    %v1176 = vmul.f32 %v1102, %v1168
    %v1177 = vmul.f32 %v1104, %v1169
    %v1178 = vpack.c.bf16 %v1174, %v1170
    %v1179 = vpack.c.bf16 %v1175, %v1171
    %v1180 = vpack.c.bf16 %v1176, %v1172
    %v1181 = vpack.c.bf16 %v1177, %v1173
    %v1182 = vld [vmem:[#allocation12] sm:$0xf]
    %v1183 = vld [vmem:[#allocation12 + $0x4] sm:$0xf]
    %v1184 = vld [vmem:[#allocation12 + $0x8] sm:$0xf]
    %v1185 = vld [vmem:[#allocation12 + $0xc] sm:$0xf]
    %v1186 = vld [vmem:[#allocation12 + $0x10] sm:$0xf]
    %v1187 = vld [vmem:[#allocation12 + $0x14] sm:$0xf]
    %v1188 = vld [vmem:[#allocation12 + $0x18] sm:$0xf]
    %v1189 = vld [vmem:[#allocation12 + $0x1c] sm:$0xf]
    %v1190 = vld [vmem:[#allocation12 + $0x20] sm:$0xf]
    %v1191 = vld [vmem:[#allocation12 + $0x24] sm:$0xf]
    %v1192 = vld [vmem:[#allocation12 + $0x28] sm:$0xf]
    %v1193 = vld [vmem:[#allocation12 + $0x2c] sm:$0xf]
    %v1194 = vld [vmem:[#allocation12 + $0x30] sm:$0xf]
    %v1195 = vld [vmem:[#allocation12 + $0x34] sm:$0xf]
    %v1196 = vld [vmem:[#allocation12 + $0x38] sm:$0xf]
    %v1197 = vld [vmem:[#allocation12 + $0x3c] sm:$0xf]
    %v1198 = vld [vmem:[#allocation12 + $0x40] sm:$0xf]
    %v1199 = vld [vmem:[#allocation12 + $0x44] sm:$0xf]
    %v1200 = vld [vmem:[#allocation12 + $0x48] sm:$0xf]
    %v1201 = vld [vmem:[#allocation12 + $0x4c] sm:$0xf]
    %v1202 = vld [vmem:[#allocation12 + $0x50] sm:$0xf]
    %v1203 = vld [vmem:[#allocation12 + $0x54] sm:$0xf]
    %v1204 = vld [vmem:[#allocation12 + $0x58] sm:$0xf]
    %v1205 = vld [vmem:[#allocation12 + $0x5c] sm:$0xf]
    %v1206 = vld [vmem:[#allocation12 + $0x60] sm:$0xf]
    %v1207 = vld [vmem:[#allocation12 + $0x64] sm:$0xf]
    %v1208 = vld [vmem:[#allocation12 + $0x68] sm:$0xf]
    %v1209 = vld [vmem:[#allocation12 + $0x6c] sm:$0xf]
    %v1210 = vld [vmem:[#allocation12 + $0x70] sm:$0xf]
    %v1211 = vld [vmem:[#allocation12 + $0x74] sm:$0xf]
    %v1212 = vld [vmem:[#allocation12 + $0x78] sm:$0xf]
    %v1213 = vld [vmem:[#allocation12 + $0x7c] sm:$0xf]
    %v1214 = vld [vmem:[#allocation12 + $0x80] sm:$0xf]
    %v1215 = vld [vmem:[#allocation12 + $0x84] sm:$0xf]
    %v1216 = vld [vmem:[#allocation12 + $0x88] sm:$0xf]
    %v1217 = vld [vmem:[#allocation12 + $0x8c] sm:$0xf]
    %v1218 = vld [vmem:[#allocation12 + $0x90] sm:$0xf]
    %v1219 = vld [vmem:[#allocation12 + $0x94] sm:$0xf]
    %v1220 = vld [vmem:[#allocation12 + $0x98] sm:$0xf]
    %v1221 = vld [vmem:[#allocation12 + $0x9c] sm:$0xf]
    %v1222 = vld [vmem:[#allocation12 + $0xa0] sm:$0xf]
    %v1223 = vld [vmem:[#allocation12 + $0xa4] sm:$0xf]
    %v1224 = vld [vmem:[#allocation12 + $0xa8] sm:$0xf]
    %v1225 = vld [vmem:[#allocation12 + $0xac] sm:$0xf]
    %v1226 = vld [vmem:[#allocation12 + $0xb0] sm:$0xf]
    %v1227 = vld [vmem:[#allocation12 + $0xb4] sm:$0xf]
    %v1228 = vld [vmem:[#allocation12 + $0xb8] sm:$0xf]
    %v1229 = vld [vmem:[#allocation12 + $0xbc] sm:$0xf]
    %v1230 = vld [vmem:[#allocation12 + $0xc0] sm:$0xf]
    %v1231 = vld [vmem:[#allocation12 + $0xc4] sm:$0xf]
    %v1232 = vld [vmem:[#allocation12 + $0xc8] sm:$0xf]
    %v1233 = vld [vmem:[#allocation12 + $0xcc] sm:$0xf]
    %v1234 = vld [vmem:[#allocation12 + $0xd0] sm:$0xf]
    %v1235 = vld [vmem:[#allocation12 + $0xd4] sm:$0xf]
    %v1236 = vld [vmem:[#allocation12 + $0xd8] sm:$0xf]
    %v1237 = vld [vmem:[#allocation12 + $0xdc] sm:$0xf]
    %v1238 = vld [vmem:[#allocation12 + $0xe0] sm:$0xf]
    %v1239 = vld [vmem:[#allocation12 + $0xe4] sm:$0xf]
    %v1240 = vld [vmem:[#allocation12 + $0xe8] sm:$0xf]
    %v1241 = vld [vmem:[#allocation12 + $0xec] sm:$0xf]
    %v1242 = vld [vmem:[#allocation12 + $0xf0] sm:$0xf]
    %v1243 = vld [vmem:[#allocation12 + $0xf4] sm:$0xf]
    %v1244 = vld [vmem:[#allocation12 + $0xf8] sm:$0xf]
    %v1245 = vld [vmem:[#allocation12 + $0xfc] sm:$0xf]
    %v1246 = vld [vmem:[%s11] sm:$0x1]
    %v1248 = vlaneseq
    %v1249 = vshrl.u32 %v1248, 7
    %v1250 = vsub.s32 0, %v1249
    %v1251 = vrot.slane %v1246, %v1250
    %v1317 = vunpack.c.l.b16 %v1182
    %v1318 = vunpack.c.l.b16 %v1183
    %v1319 = vunpack.c.l.b16 %v1184
    %v1320 = vunpack.c.l.b16 %v1185
    %v1321 = vunpack.c.l.b16 %v1186
    %v1322 = vunpack.c.l.b16 %v1187
    %v1323 = vunpack.c.l.b16 %v1188
    %v1324 = vunpack.c.l.b16 %v1189
    %v1325 = vunpack.c.l.b16 %v1190
    %v1326 = vunpack.c.l.b16 %v1191
    %v1327 = vunpack.c.l.b16 %v1192
    %v1328 = vunpack.c.l.b16 %v1193
    %v1329 = vunpack.c.l.b16 %v1194
    %v1330 = vunpack.c.l.b16 %v1195
    %v1331 = vunpack.c.l.b16 %v1196
    %v1332 = vunpack.c.l.b16 %v1197
    %v1333 = vunpack.c.l.b16 %v1198
    %v1334 = vunpack.c.l.b16 %v1199
    %v1335 = vunpack.c.l.b16 %v1200
    %v1336 = vunpack.c.l.b16 %v1201
    %v1337 = vunpack.c.l.b16 %v1202
    %v1338 = vunpack.c.l.b16 %v1203
    %v1339 = vunpack.c.l.b16 %v1204
    %v1340 = vunpack.c.l.b16 %v1205
    %v1341 = vunpack.c.l.b16 %v1206
    %v1342 = vunpack.c.l.b16 %v1207
    %v1343 = vunpack.c.l.b16 %v1208
    %v1344 = vunpack.c.l.b16 %v1209
    %v1345 = vunpack.c.l.b16 %v1210
    %v1346 = vunpack.c.l.b16 %v1211
    %v1347 = vunpack.c.l.b16 %v1212
    %v1348 = vunpack.c.l.b16 %v1213
    %v1349 = vunpack.c.l.b16 %v1214
    %v1350 = vunpack.c.l.b16 %v1215
    %v1351 = vunpack.c.l.b16 %v1216
    %v1352 = vunpack.c.l.b16 %v1217
    %v1353 = vunpack.c.l.b16 %v1218
    %v1354 = vunpack.c.l.b16 %v1219
    %v1355 = vunpack.c.l.b16 %v1220
    %v1356 = vunpack.c.l.b16 %v1221
    %v1357 = vunpack.c.l.b16 %v1222
    %v1358 = vunpack.c.l.b16 %v1223
    %v1359 = vunpack.c.l.b16 %v1224
    %v1360 = vunpack.c.l.b16 %v1225
    %v1361 = vunpack.c.l.b16 %v1226
    %v1362 = vunpack.c.l.b16 %v1227
    %v1363 = vunpack.c.l.b16 %v1228
    %v1364 = vunpack.c.l.b16 %v1229
    %v1365 = vunpack.c.l.b16 %v1230
    %v1366 = vunpack.c.l.b16 %v1231
    %v1367 = vunpack.c.l.b16 %v1232
    %v1368 = vunpack.c.l.b16 %v1233
    %v1369 = vunpack.c.l.b16 %v1234
    %v1370 = vunpack.c.l.b16 %v1235
    %v1371 = vunpack.c.l.b16 %v1236
    %v1372 = vunpack.c.l.b16 %v1237
    %v1373 = vunpack.c.l.b16 %v1238
    %v1374 = vunpack.c.l.b16 %v1239
    %v1375 = vunpack.c.l.b16 %v1240
    %v1376 = vunpack.c.l.b16 %v1241
    %v1377 = vunpack.c.l.b16 %v1242
    %v1378 = vunpack.c.l.b16 %v1243
    %v1379 = vunpack.c.l.b16 %v1244
    %v1380 = vunpack.c.l.b16 %v1245
    %v1381 = vpack.c.b16 %v1318, %v1317
    %v1382 = vpack.c.b16 %v1320, %v1319
    %v1383 = vpack.c.b16 %v1322, %v1321
    %v1384 = vpack.c.b16 %v1324, %v1323
    %v1385 = vpack.c.b16 %v1326, %v1325
    %v1386 = vpack.c.b16 %v1328, %v1327
    %v1387 = vpack.c.b16 %v1330, %v1329
    %v1388 = vpack.c.b16 %v1332, %v1331
    %v1389 = vpack.c.b16 %v1334, %v1333
    %v1390 = vpack.c.b16 %v1336, %v1335
    %v1391 = vpack.c.b16 %v1338, %v1337
    %v1392 = vpack.c.b16 %v1340, %v1339
    %v1393 = vpack.c.b16 %v1342, %v1341
    %v1394 = vpack.c.b16 %v1344, %v1343
    %v1395 = vpack.c.b16 %v1346, %v1345
    %v1396 = vpack.c.b16 %v1348, %v1347
    %v1397 = vpack.c.b16 %v1350, %v1349
    %v1398 = vpack.c.b16 %v1352, %v1351
    %v1399 = vpack.c.b16 %v1354, %v1353
    %v1400 = vpack.c.b16 %v1356, %v1355
    %v1401 = vpack.c.b16 %v1358, %v1357
    %v1402 = vpack.c.b16 %v1360, %v1359
    %v1403 = vpack.c.b16 %v1362, %v1361
    %v1404 = vpack.c.b16 %v1364, %v1363
    %v1405 = vpack.c.b16 %v1366, %v1365
    %v1406 = vpack.c.b16 %v1368, %v1367
    %v1407 = vpack.c.b16 %v1370, %v1369
    %v1408 = vpack.c.b16 %v1372, %v1371
    %v1409 = vpack.c.b16 %v1374, %v1373
    %v1410 = vpack.c.b16 %v1376, %v1375
    %v1411 = vpack.c.b16 %v1378, %v1377
    %v1412 = vpack.c.b16 %v1380, %v1379
    %1445 = vmatprep.subr.bf16.mxu0 0
    %1446 = vmatpush1.bf16.msra.mxu0 %v1381
    %1447 = vmatprep.subr.bf16.mxu0 0
    %1448 = vmatpush1.bf16.msra.mxu0 %v1382
    %1449 = vmatprep.subr.bf16.mxu0 0
    %1450 = vmatpush1.bf16.msra.mxu0 %v1383
    %1451 = vmatprep.subr.bf16.mxu0 0
    %1452 = vmatpush1.bf16.msra.mxu0 %v1384
    %1453 = vmatprep.subr.bf16.mxu0 0
    %1454 = vmatpush1.bf16.msra.mxu0 %v1385
    %1455 = vmatprep.subr.bf16.mxu0 0
    %1456 = vmatpush1.bf16.msra.mxu0 %v1386
    %1457 = vmatprep.subr.bf16.mxu0 0
    %1458 = vmatpush1.bf16.msra.mxu0 %v1387
    %1459 = vmatprep.subr.bf16.mxu0 0
    %1460 = vmatpush1.bf16.msra.mxu0 %v1388
    %1461 = vmatprep.subr.bf16.mxu0 0
    %1462 = vmatpush1.bf16.msra.mxu0 %v1389
    %1463 = vmatprep.subr.bf16.mxu0 0
    %1464 = vmatpush1.bf16.msra.mxu0 %v1390
    %1465 = vmatprep.subr.bf16.mxu0 0
    %1466 = vmatpush1.bf16.msra.mxu0 %v1391
    %1467 = vmatprep.subr.bf16.mxu0 0
    %1468 = vmatpush1.bf16.msra.mxu0 %v1392
    %1469 = vmatprep.subr.bf16.mxu0 0
    %1470 = vmatpush1.bf16.msra.mxu0 %v1393
    %1471 = vmatprep.subr.bf16.mxu0 0
    %1472 = vmatpush1.bf16.msra.mxu0 %v1394
    %1473 = vmatprep.subr.bf16.mxu0 0
    %1474 = vmatpush1.bf16.msra.mxu0 %v1395
    %1475 = vmatprep.subr.bf16.mxu0 0
    %1476 = vmatpush1.bf16.msra.mxu0 %v1396
    %1477 = vmatprep.mubr.bf16.mxu0 %v1179
    %1478 = vmatmul.mubr.bf16.gmra.mrb[0].mxu0 %v1178
    %v1479 = vpop.f32.mrb[0].mxu0
    %v1480 = vadd.f32 %v1251, %v1479
    %v1481 = vpop.f32.mrb[0].mxu0
    %v1482 = vpop.f32.mrb[0].mxu0
    %v1483 = vadd.f32 %v1251, %v1482
    %v1484 = vpop.f32.mrb[0].mxu0
    %1485 = vdwg.mxu0
    %1486 = vmatprep.subr.bf16.mxu0 0
    %1487 = vmatpush1.bf16.msra.mxu0 %v1397
    %1488 = vmatprep.subr.bf16.mxu0 0
    %1489 = vmatpush1.bf16.msra.mxu0 %v1398
    %1490 = vmatprep.subr.bf16.mxu0 0
    %1491 = vmatpush1.bf16.msra.mxu0 %v1399
    %1492 = vmatprep.subr.bf16.mxu0 0
    %1493 = vmatpush1.bf16.msra.mxu0 %v1400
    %1494 = vmatprep.subr.bf16.mxu0 0
    %1495 = vmatpush1.bf16.msra.mxu0 %v1401
    %1496 = vmatprep.subr.bf16.mxu0 0
    %1497 = vmatpush1.bf16.msra.mxu0 %v1402
    %1498 = vmatprep.subr.bf16.mxu0 0
    %1499 = vmatpush1.bf16.msra.mxu0 %v1403
    %1500 = vmatprep.subr.bf16.mxu0 0
    %1501 = vmatpush1.bf16.msra.mxu0 %v1404
    %1502 = vmatprep.subr.bf16.mxu0 0
    %1503 = vmatpush1.bf16.msra.mxu0 %v1405
    %1504 = vmatprep.subr.bf16.mxu0 0
    %1505 = vmatpush1.bf16.msra.mxu0 %v1406
    %1506 = vmatprep.subr.bf16.mxu0 0
    %1507 = vmatpush1.bf16.msra.mxu0 %v1407
    %1508 = vmatprep.subr.bf16.mxu0 0
    %1509 = vmatpush1.bf16.msra.mxu0 %v1408
    %1510 = vmatprep.subr.bf16.mxu0 0
    %1511 = vmatpush1.bf16.msra.mxu0 %v1409
    %1512 = vmatprep.subr.bf16.mxu0 0
    %1513 = vmatpush1.bf16.msra.mxu0 %v1410
    %1514 = vmatprep.subr.bf16.mxu0 0
    %1515 = vmatpush1.bf16.msra.mxu0 %v1411
    %1516 = vmatprep.subr.bf16.mxu0 0
    %1517 = vmatpush1.bf16.msra.mxu0 %v1412
    %1518 = vmatprep.mubr.bf16.mxu0 %v1181
    %1519 = vmatmul.mubr.bf16.gmra.mrb[0].mxu0 %v1180
    %v1520 = vpop.f32.mrb[0].mxu0
    %v1521 = vadd.f32 %v1480, %v1520
    %v1522 = vpop.f32.mrb[0].mxu0
    %v1523 = vpop.f32.mrb[0].mxu0
    %v1524 = vadd.f32 %v1483, %v1523
    %v1525 = vpop.f32.mrb[0].mxu0
    %1526 = vdwg.mxu0
    %v1527 = vadd.f32 %v803, %v1521
    %v1528 = vadd.f32 %v804, %v1524
    %v1529 = vld [vmem:[%s12] sm:$0x1]
    %v1530 = vld [vmem:[%s13] sm:$0x1]
    %1531 = vadd.xlane.f32.xlu0 %v1527
    %v1532 = vpop.xlane.xlu0 %1531
    %1533 = vadd.xlane.f32.xlu0 %v1528
    %v1534 = vpop.xlane.xlu0 %1533
    %v1535 = vmul.f32 %v1532, %v770
    %v1536 = vmul.f32 %v1534, %v770
    %v1537 = vsub.f32 %v1527, %v1535
    %v1538 = vsub.f32 %v1528, %v1536
    %v1539 = vmul.f32 %v1537, %v1537
    %v1540 = vmul.f32 %v1538, %v1538
    %1541 = vadd.xlane.f32.xlu0 %v1539
    %v1542 = vpop.xlane.xlu0 %1541
    %1543 = vadd.xlane.f32.xlu0 %v1540
    %v1544 = vpop.xlane.xlu0 %1543
    %v1545 = vmul.f32 %v1542, %v770
    %v1546 = vmul.f32 %v1544, %v770
    %v1547 = vadd.f32 %v1545, 1e-12
    %v1548 = vadd.f32 %v1546, 1e-12
    %v1549 = vrsqrt.pop %v1547
    %v1550 = vrsqrt.pop %v1548
    %v1551 = vmul.f32 %v1537, %v1549
    %v1552 = vmul.f32 %v1538, %v1550
    %v1554 = vlaneseq
    %v1555 = vshrl.u32 %v1554, 7
    %v1556 = vsub.s32 0, %v1555
    %v1557 = vrot.slane %v1529, %v1556
    %v1559 = vmul.f32 %v1551, %v1557
    %v1560 = vmul.f32 %v1552, %v1557
    %v1562 = vlaneseq
    %v1563 = vshrl.u32 %v1562, 7
    %v1564 = vsub.s32 0, %v1563
    %v1565 = vrot.slane %v1530, %v1564
    %v1567 = vadd.f32 %v1559, %v1565
    %v1568 = vadd.f32 %v1560, %v1565
    %v1569 = vpack.c.bf16 %v1567, %v1567
    %v1570 = vpack.c.bf16 %v1568, %v1568
    %v1571 = vld [vmem:[#allocation13] sm:$0xf]
    %v1572 = vld [vmem:[#allocation13 + $0x4] sm:$0xf]
    %v1573 = vld [vmem:[#allocation13 + $0x8] sm:$0xf]
    %v1574 = vld [vmem:[#allocation13 + $0xc] sm:$0xf]
    %v1575 = vld [vmem:[#allocation13 + $0x10] sm:$0xf]
    %v1576 = vld [vmem:[#allocation13 + $0x14] sm:$0xf]
    %v1577 = vld [vmem:[#allocation13 + $0x18] sm:$0xf]
    %v1578 = vld [vmem:[#allocation13 + $0x1c] sm:$0xf]
    %v1579 = vld [vmem:[#allocation13 + $0x20] sm:$0xf]
    %v1580 = vld [vmem:[#allocation13 + $0x24] sm:$0xf]
    %v1581 = vld [vmem:[#allocation13 + $0x28] sm:$0xf]
    %v1582 = vld [vmem:[#allocation13 + $0x2c] sm:$0xf]
    %v1583 = vld [vmem:[#allocation13 + $0x30] sm:$0xf]
    %v1584 = vld [vmem:[#allocation13 + $0x34] sm:$0xf]
    %v1585 = vld [vmem:[#allocation13 + $0x38] sm:$0xf]
    %v1586 = vld [vmem:[#allocation13 + $0x3c] sm:$0xf]
    %v1587 = vld [vmem:[%s15] sm:$0x1]
    %v1589 = vlaneseq
    %v1590 = vshrl.u32 %v1589, 7
    %v1591 = vsub.s32 0, %v1590
    %v1592 = vrot.slane %v1587, %v1591
    %v1596 = vunpack.c.l.b16 %v1569
    %v1597 = vunpack.c.l.b16 %v1570
    %v1598 = vrot.slane %v1597, 7
    %vm1599 = vcmask 1041409
    %v1600 = vsel %vm1599, %v1598, %v1596
    %v1601 = vpack.c.b16 %v1600, %v1600
    %v1619 = vunpack.c.l.b16 %v1571
    %v1620 = vunpack.c.l.b16 %v1572
    %v1621 = vunpack.c.l.b16 %v1573
    %v1622 = vunpack.c.l.b16 %v1574
    %v1623 = vunpack.c.l.b16 %v1575
    %v1624 = vunpack.c.l.b16 %v1576
    %v1625 = vunpack.c.l.b16 %v1577
    %v1626 = vunpack.c.l.b16 %v1578
    %v1627 = vunpack.c.l.b16 %v1579
    %v1628 = vunpack.c.l.b16 %v1580
    %v1629 = vunpack.c.l.b16 %v1581
    %v1630 = vunpack.c.l.b16 %v1582
    %v1631 = vunpack.c.l.b16 %v1583
    %v1632 = vunpack.c.l.b16 %v1584
    %v1633 = vunpack.c.l.b16 %v1585
    %v1634 = vunpack.c.l.b16 %v1586
    %v1635 = vpack.c.b16 %v1620, %v1619
    %v1636 = vpack.c.b16 %v1622, %v1621
    %v1637 = vpack.c.b16 %v1624, %v1623
    %v1638 = vpack.c.b16 %v1626, %v1625
    %v1639 = vpack.c.b16 %v1628, %v1627
    %v1640 = vpack.c.b16 %v1630, %v1629
    %v1641 = vpack.c.b16 %v1632, %v1631
    %v1642 = vpack.c.b16 %v1634, %v1633
    %1651 = vmatprep.subr.bf16.mxu0 0
    %1652 = vmatpush1.bf16.msra.mxu0 %v1635
    %1653 = vmatprep.subr.bf16.mxu0 0
    %1654 = vmatpush1.bf16.msra.mxu0 %v1636
    %1655 = vmatprep.subr.bf16.mxu0 0
    %1656 = vmatpush1.bf16.msra.mxu0 %v1637
    %1657 = vmatprep.subr.bf16.mxu0 0
    %1658 = vmatpush1.bf16.msra.mxu0 %v1638
    %1659 = vmatprep.subr.bf16.mxu0 0
    %1660 = vmatpush1.bf16.msra.mxu0 %v1639
    %1661 = vmatprep.subr.bf16.mxu0 0
    %1662 = vmatpush1.bf16.msra.mxu0 %v1640
    %1663 = vmatprep.subr.bf16.mxu0 0
    %1664 = vmatpush1.bf16.msra.mxu0 %v1641
    %1665 = vmatprep.subr.bf16.mxu0 0
    %1666 = vmatpush1.bf16.msra.mxu0 %v1642
    %1667 = vmatprep.subr.bf16.mxu0 0
    %1668 = vmatpush1.bf16.msra.mxu0 0
    %1669 = vmatprep.subr.bf16.mxu0 0
    %1670 = vmatpush1.bf16.msra.mxu0 0
    %1671 = vmatprep.subr.bf16.mxu0 0
    %1672 = vmatpush1.bf16.msra.mxu0 0
    %1673 = vmatprep.subr.bf16.mxu0 0
    %1674 = vmatpush1.bf16.msra.mxu0 0
    %1675 = vmatprep.subr.bf16.mxu0 0
    %1676 = vmatpush1.bf16.msra.mxu0 0
    %1677 = vmatprep.subr.bf16.mxu0 0
    %1678 = vmatpush1.bf16.msra.mxu0 0
    %1679 = vmatprep.subr.bf16.mxu0 0
    %1680 = vmatpush1.bf16.msra.mxu0 0
    %1681 = vmatprep.subr.bf16.mxu0 0
    %1682 = vmatpush1.bf16.msra.mxu0 0
    %1683 = vmatprep.mubr.bf16.mxu0 0
    %1684 = vmatmul.mubr.bf16.gmra.mrb[0].mxu0 %v1601
    %v1685 = vpop.f32.mrb[0].mxu0
    %v1686 = vadd.f32 %v1592, %v1685
    %v1687 = vpop.f32.mrb[0].mxu0
    %v1688 = vpop.f32.mrb[0].mxu0
    %v1689 = vpop.f32.mrb[0].mxu0
    %1690 = vdwg.mxu0
    %v1691 = vtanh.pop %v1686
    %v1692 = vpack.c.bf16 %v1691, %v1691
    %v1693 = vld [vmem:[#allocation15] sm:$0xf]
    %v1694 = vld [vmem:[#allocation15 + $0x4] sm:$0xf]
    %v1695 = vld [vmem:[#allocation15 + $0x8] sm:$0xf]
    %v1696 = vld [vmem:[#allocation15 + $0xc] sm:$0xf]
    %v1697 = vld [vmem:[#allocation15 + $0x10] sm:$0xf]
    %v1698 = vld [vmem:[#allocation15 + $0x14] sm:$0xf]
    %v1699 = vld [vmem:[#allocation15 + $0x18] sm:$0xf]
    %v1700 = vld [vmem:[#allocation15 + $0x1c] sm:$0xf]
    %v1701 = vld [vmem:[#allocation15 + $0x20] sm:$0xf]
    %v1702 = vld [vmem:[#allocation15 + $0x24] sm:$0xf]
    %v1703 = vld [vmem:[#allocation15 + $0x28] sm:$0xf]
    %v1704 = vld [vmem:[#allocation15 + $0x2c] sm:$0xf]
    %v1705 = vld [vmem:[#allocation15 + $0x30] sm:$0xf]
    %v1706 = vld [vmem:[#allocation15 + $0x34] sm:$0xf]
    %v1707 = vld [vmem:[#allocation15 + $0x38] sm:$0xf]
    %v1708 = vld [vmem:[#allocation15 + $0x3c] sm:$0xf]
    %v1709 = vld [vmem:[%s17] sm:$0x1]
    %v1711 = vlaneseq
    %v1712 = vshrl.u32 %v1711, 7
    %v1713 = vsub.s32 0, %v1712
    %v1714 = vrot.slane %v1709, %v1713
    %v1732 = vunpack.c.l.b16 %v1693
    %v1733 = vunpack.c.l.b16 %v1694
    %v1734 = vunpack.c.l.b16 %v1695
    %v1735 = vunpack.c.l.b16 %v1696
    %v1736 = vunpack.c.l.b16 %v1697
    %v1737 = vunpack.c.l.b16 %v1698
    %v1738 = vunpack.c.l.b16 %v1699
    %v1739 = vunpack.c.l.b16 %v1700
    %v1740 = vunpack.c.l.b16 %v1701
    %v1741 = vunpack.c.l.b16 %v1702
    %v1742 = vunpack.c.l.b16 %v1703
    %v1743 = vunpack.c.l.b16 %v1704
    %v1744 = vunpack.c.l.b16 %v1705
    %v1745 = vunpack.c.l.b16 %v1706
    %v1746 = vunpack.c.l.b16 %v1707
    %v1747 = vunpack.c.l.b16 %v1708
    %v1748 = vpack.c.b16 %v1733, %v1732
    %v1749 = vpack.c.b16 %v1735, %v1734
    %v1750 = vpack.c.b16 %v1737, %v1736
    %v1751 = vpack.c.b16 %v1739, %v1738
    %v1752 = vpack.c.b16 %v1741, %v1740
    %v1753 = vpack.c.b16 %v1743, %v1742
    %v1754 = vpack.c.b16 %v1745, %v1744
    %v1755 = vpack.c.b16 %v1747, %v1746
    %1764 = vmatprep.subr.bf16.mxu0 0
    %1765 = vmatpush1.bf16.msra.mxu0 %v1748
    %1766 = vmatprep.subr.bf16.mxu0 0
    %1767 = vmatpush1.bf16.msra.mxu0 %v1749
    %1768 = vmatprep.subr.bf16.mxu0 0
    %1769 = vmatpush1.bf16.msra.mxu0 %v1750
    %1770 = vmatprep.subr.bf16.mxu0 0
    %1771 = vmatpush1.bf16.msra.mxu0 %v1751
    %1772 = vmatprep.subr.bf16.mxu0 0
    %1773 = vmatpush1.bf16.msra.mxu0 %v1752
    %1774 = vmatprep.subr.bf16.mxu0 0
    %1775 = vmatpush1.bf16.msra.mxu0 %v1753
    %1776 = vmatprep.subr.bf16.mxu0 0
    %1777 = vmatpush1.bf16.msra.mxu0 %v1754
    %1778 = vmatprep.subr.bf16.mxu0 0
    %1779 = vmatpush1.bf16.msra.mxu0 %v1755
    %1780 = vmatprep.subr.bf16.mxu0 0
    %1781 = vmatpush1.bf16.msra.mxu0 0
    %1782 = vmatprep.subr.bf16.mxu0 0
    %1783 = vmatpush1.bf16.msra.mxu0 0
    %1784 = vmatprep.subr.bf16.mxu0 0
    %1785 = vmatpush1.bf16.msra.mxu0 0
    %1786 = vmatprep.subr.bf16.mxu0 0
    %1787 = vmatpush1.bf16.msra.mxu0 0
    %1788 = vmatprep.subr.bf16.mxu0 0
    %1789 = vmatpush1.bf16.msra.mxu0 0
    %1790 = vmatprep.subr.bf16.mxu0 0
    %1791 = vmatpush1.bf16.msra.mxu0 0
    %1792 = vmatprep.subr.bf16.mxu0 0
    %1793 = vmatpush1.bf16.msra.mxu0 0
    %1794 = vmatprep.subr.bf16.mxu0 0
    %1795 = vmatpush1.bf16.msra.mxu0 0
    %1796 = vmatprep.mubr.bf16.mxu0 0
    %1797 = vmatmul.mubr.bf16.gmra.mrb[0].mxu0 %v1692
    %v1798 = vpop.f32.mrb[0].mxu0
    %v1799 = vadd.f32 %v1714, %v1798
    %v1800 = vpop.f32.mrb[0].mxu0
    %v1801 = vpop.f32.mrb[0].mxu0
    %v1802 = vpop.f32.mrb[0].mxu0
    %1803 = vdwg.mxu0
    %1804 = vst [vmem:[#allocation16] sm:$0x3] %v1799
    // Predicated region
    $region106: #{tpu_custom_call.1} parent=1 // pred_check
      _
    $region107: #{tpu_custom_call.1} parent=1 // pred_check_branch
      %1806 = sbr.rel (0) target = $region109
    $region108: #{tpu_custom_call.1} parent=1 // pred_region
      %s1808 = ssub.s32 32, 32
      %1809 = vsyncadd [#allocation4], %s1808
      %s1811 = sshll.u32 [#allocation16], 4
      %s1812 = int_to_ptr.vmem [resolvable:$true] %s1811
      %1814 = dma.vmem_to_hbm [thread:$0]  %s1812, 32, %s18, [#allocation4]
    $region109: #{tpu_custom_call.1} parent=1 // pred_fallthru
      _
    // Predicated region
    $region110: #{tpu_custom_call.1} parent=1 // pred_check
      _
    $region111: #{tpu_custom_call.1} parent=1 // pred_check_branch
      %1816 = sbr.rel (0) target = $region113
    $region112: #{tpu_custom_call.1} parent=1 // pred_region
      %1817 = dma.done [#allocation4], 32
    $region113: #{tpu_custom_call.1} parent=1 // pred_fallthru
      _
    %1818 = vsyncpa [#allocation3], 1
    %1819 = vsyncpa [#allocation8], 1
    %1820 = vsyncpa [#allocation11], 1
    %1821 = vsyncpa [#allocation14], 1
    %1822 = vsyncpa [#allocation4], 1
    %1823 = vsyncpa [#allocation5], 1

</llo_original>
